<compile_context>
chip_gen: v5e
topology: v5e:2x2
jax: 0.10.0
libtpu: 0.0.40
codegen_flags: <defaults>
</compile_context>

<pallas_src>
import functools
import math

import jax
import jax.numpy as jnp
from jax.experimental import pallas as pl
from jax.experimental.pallas import tpu as pltpu

_EPS = float(jnp.finfo(jnp.float32).eps)   # torch.finfo(torch.float).eps
_CAP = -math.log(_EPS)                     # clamp(diff, min=eps) -> -log(eps) ceiling
_LN_EPS = 1e-5                             # nn.LayerNorm default eps
_Q_STD = 0.05                              # q_z = Normal(mu_z, 0.05)
_INV255 = 1.0 / 255.0
_CLIP = -87.0                              # keep exp(-c_floor) finite in float32


# ---------------------------------------------------------------------------
# Fused kernel
# ---------------------------------------------------------------------------

def _lae_fused_kernel(scal_ref, x_ref, noise_ref, w_in_ref, w_mid_ref, w_out_ref,
                      vec_ref, bout_ref, o_ref, *, kl_const, q_std):
    inv_sigma = scal_ref[0]     # 1 / sigma_x
    log_term = scal_ref[1]      # -log(1 - exp(-delta)),  delta = (2/255)/sigma_x
    ed = scal_ref[2]            # exp(-delta)

    def mm(act, w):             # bf16 MXU operands, f32 accumulation; w is (in, out)
        return jax.lax.dot_general(act, w,
                                   dimension_numbers=(((1,), (0,)), ((), ())),
                                   preferred_element_type=jnp.float32)

    def vec(r):                 # one (1, nh) f32 row of the packed bias/gamma/beta slab
        return vec_ref[r:r + 1, :]

    def block(act, w, r):       # Linear -> LayerNorm -> ReLU   (rows r, r+1, r+2)
        h = mm(act, w) + vec(r)
        mean = jnp.mean(h, axis=-1, keepdims=True)
        var = jnp.mean(jnp.square(h - mean), axis=-1, keepdims=True)
        hn = (h - mean) * jax.lax.rsqrt(var + _LN_EPS)
        return jnp.maximum(hn * vec(r + 1) + vec(r + 2), 0.0).astype(jnp.bfloat16)

    # ---- encoder ----  (2*x - 1 computed in-kernel; bf16 cast is short-lived)
    h = block((2.0 * x_ref[...] - 1.0).astype(jnp.bfloat16), w_in_ref[...], 0)
    h = block(h, w_mid_ref[0], 3)
    h = block(h, w_mid_ref[1], 6)
    mu_z = mm(h, w_mid_ref[2]) + vec(9)        # (tb, nh); columns >= nz are exactly 0

    # z ~ Normal(mu_z, 0.05)
    z = (mu_z + q_std * noise_ref[...]).astype(jnp.bfloat16)

    # ---- decoder ----  (dec0 weight rows >= nz are zero, so padded z cols are inert)
    d = block(z, w_mid_ref[3], 10)
    d = block(d, w_mid_ref[4], 13)
    d = block(d, w_mid_ref[5], 16)
    mu_x = mm(d, w_out_ref[...]) + bout_ref[...]            # (tb, nxs) f32

    # ---- discretized logistic energy: one exp + one log per element ----
    x = 2.0 * x_ref[...] - 1.0                               # re-read (short live range)
    cf = (x - _INV255 - mu_x) * inv_sigma                    # c_floor; c_ceil = cf + delta
    cfc = jnp.maximum(cf, _CLIP)
    u = jnp.exp(-cfc)                                        # exp(-c_floor), finite
    one_u = 1.0 + u
    one_ue = 1.0 + u * ed                                    # 1 + exp(-c_ceil)
    hi = (x + _INV255) > 1.0
    lo = (x - _INV255) < -1.0
    p_sel = jnp.where(lo, one_ue, jnp.where(hi, one_u, one_u * one_ue))
    a_sel = jnp.where(lo, 0.0, jnp.where(hi, cfc, cf + log_term))
    cap = jnp.where(lo | hi, jnp.inf, _CAP)                  # clamp only the interior branch
    energy = jnp.maximum(jnp.minimum(a_sel + jnp.log(p_sel), cap), 0.0)
    e_sum = jnp.sum(energy, axis=-1, keepdims=True)          # (tb, 1)

    # KL( N(mu_z, 0.05) || N(0,1) ) summed over nz dims; padded mu_z cols are exactly 0
    kl = kl_const + 0.5 * jnp.sum(mu_z * mu_z, axis=-1, keepdims=True)

    o_ref[...] = e_sum + kl


# ---------------------------------------------------------------------------
# Parameter construction (mirrors LAE.reset_parameters; packed for the kernel)
# ---------------------------------------------------------------------------

def init_lae_params(key, size, nx, nh, nz):
    nxs = nx * size * size
    ortho = jax.nn.initializers.orthogonal()     # nn.init.orthogonal_, zero biases
    ks = jax.random.split(key, 8)

    def lin_w(k, in_f, out_f):
        # torch Linear weight is (out, in); orthogonal-init there, store transposed (in, out)
        return ortho(k, (out_f, in_f), jnp.float32).T

    enc0 = lin_w(ks[0], nxs, nh)
    enc1 = lin_w(ks[1], nh, nh)
    enc2 = lin_w(ks[2], nh, nh)
    enc_out = lin_w(ks[3], nh, nz)               # (nh, nz)
    dec0 = lin_w(ks[4], nz, nh)                  # (nz, nh)
    dec1 = lin_w(ks[5], nh, nh)
    dec2 = lin_w(ks[6], nh, nh)
    dec_out = lin_w(ks[7], nh, nxs)              # (nh, nxs)

    # pad nz -> nh so every mid matmul is (nh, nh): zero cols / zero rows are inert
    enc_out_p = jnp.zeros((nh, nh), jnp.float32).at[:, :nz].set(enc_out)
    dec0_p = jnp.zeros((nh, nh), jnp.float32).at[:nz, :].set(dec0)
    w_mid = jnp.stack([enc1, enc2, enc_out_p, dec0_p, dec1, dec2]).astype(jnp.bfloat16)

    # bias/gamma/beta slab: 3x(b,g,beta) enc, enc_out bias, 3x(b,g,beta) dec -> (19, nh)
    zeros = jnp.zeros((nh,), jnp.float32)
    ones = jnp.ones((nh,), jnp.float32)
    rows = []
    for _ in range(3):
        rows += [zeros, ones, zeros]
    rows += [zeros]                              # enc_out bias (zero-padded to nh)
    for _ in range(3):
        rows += [zeros, ones, zeros]
    vec32 = jnp.stack(rows)                      # (19, nh)

    return {
        "w_in": enc0.astype(jnp.bfloat16),       # (nxs, nh)
        "w_mid": w_mid,                          # (6, nh, nh)
        "w_out": dec_out.astype(jnp.bfloat16),   # (nh, nxs)
        "vec32": vec32,                          # (19, nh) f32
        "b_out": jnp.zeros((1, nxs), jnp.float32),
        "logit_tau": jnp.zeros((1,), jnp.float32),
    }


# ---------------------------------------------------------------------------
# LAE eval-mode forward (single fused pallas_call)
# ---------------------------------------------------------------------------

def _round_up(n, m):
    return ((n + m - 1) // m) * m


@jax.jit
def lae_forward_eval(params, x, noise):
    """x: (B, nx, size, size) float32 pixels in [0,1]; noise: (B, nz) std normal."""
    B = x.shape[0]
    nxs, nh = params["w_in"].shape
    nz = noise.shape[1]
    x2 = x.reshape(B, nxs)                                    # metadata-only flatten
    noise_p = noise if nz == nh else jnp.pad(noise, ((0, 0), (0, nh - nz)))

    # energy scalars (one softplus/sqrt/exp/log on the host side, SMEM in-kernel)
    inv_sigma = jnp.sqrt(jax.nn.softplus(params["logit_tau"][0]))   # 1 / sigma_x
    delta = (2.0 / 255.0) * inv_sigma
    ed = jnp.exp(-delta)
    log_term = -jnp.log1p(-ed)
    scalars = jnp.stack([inv_sigma, log_term, ed]).astype(jnp.float32)

    # batch tiling: >=2 grid steps whenever possible (v7x dual-TC), tile capped at 512
    padded8 = _round_up(B, 8)
    if padded8 >= 16:
        tile_b = min(512, _round_up((padded8 + 1) // 2, 8))
    else:
        tile_b = padded8
    grid = (pl.cdiv(B, tile_b),)

    kl_const = float(nz) * (-math.log(_Q_STD) + 0.5 * _Q_STD * _Q_STD - 0.5)
    kernel = functools.partial(_lae_fused_kernel, kl_const=kl_const, q_std=_Q_STD)

    out = pl.pallas_call(
        kernel,
        out_shape=jax.ShapeDtypeStruct((B, 1), jnp.float32),
        grid=grid,
        in_specs=[
            pl.BlockSpec(memory_space=pltpu.MemorySpace.SMEM),       # scalars (3,)
            pl.BlockSpec((tile_b, nxs), lambda i: (i, 0)),           # pixels
            pl.BlockSpec((tile_b, nh), lambda i: (i, 0)),            # noise (padded to nh)
            pl.BlockSpec((nxs, nh), lambda i: (0, 0)),               # w_in       (resident)
            pl.BlockSpec((6, nh, nh), lambda i: (0, 0, 0)),          # w_mid slab (resident)
            pl.BlockSpec((nh, nxs), lambda i: (0, 0)),               # w_out      (resident)
            pl.BlockSpec((19, nh), lambda i: (0, 0)),                # bias/gamma/beta slab
            pl.BlockSpec((1, nxs), lambda i: (0, 0)),                # dec_out bias
        ],
        out_specs=pl.BlockSpec((tile_b, 1), lambda i: (i, 0)),
        compiler_params=pltpu.CompilerParams(
            dimension_semantics=("parallel",),
            vmem_limit_bytes=40 * 1024 * 1024),
    )(scalars, x2, noise_p, params["w_in"], params["w_mid"], params["w_out"],
      params["vec32"], params["b_out"])

    return out[:, 0]                                                  # (B,)


# ---------------------------------------------------------------------------
# Main
# ---------------------------------------------------------------------------

if __name__ == "__main__":
    size, nx, nh, nz = 16, 4, 32, 8
    batch = 2

    key = jax.random.PRNGKey(0)
    k_param, k_x, k_noise = jax.random.split(key, 3)

    params = init_lae_params(k_param, size, nx, nh, nz)
    x = jax.random.uniform(k_x, (batch, nx, size, size), jnp.float32)   # pixels in [0,1]
    noise = jax.random.normal(k_noise, (batch, nz), jnp.float32)

    loss = lae_forward_eval(params, x, noise)
    jax.block_until_ready(loss)

    assert loss.shape == (batch,)
    assert bool(jnp.all(jnp.isfinite(loss)))
    print("KERNEL_OK")
</pallas_src>

<mosaic_0001>
module attributes {stable_mosaic.version = 11 : i64} {
  func.func @_lae_fused_kernel(%arg0: i32, %arg1: memref<3xf32, #tpu.memory_space<smem>>, %arg2: memref<8x1024xf32, #tpu.memory_space<vmem>>, %arg3: memref<8x32xf32, #tpu.memory_space<vmem>>, %arg4: memref<1024x32xbf16, #tpu.memory_space<vmem>>, %arg5: memref<6x32x32xbf16, #tpu.memory_space<vmem>>, %arg6: memref<32x1024xbf16, #tpu.memory_space<vmem>>, %arg7: memref<19x32xf32, #tpu.memory_space<vmem>>, %arg8: memref<1x1024xf32, #tpu.memory_space<vmem>>, %arg9: memref<8x1xf32, #tpu.memory_space<vmem>>) attributes {dimension_semantics = [#tpu.dimension_semantics<parallel>], iteration_bounds = array<i64: 1>, scalar_prefetch = 0 : i64, scratch_operands = 0 : i64, tpu.core_type = #tpu.core_type<tc>, window_params = [{transform_indices = @transform_0, window_bounds = array<i64: 3>}, {transform_indices = @transform_1, window_bounds = array<i64: 8, 1024>}, {transform_indices = @transform_2, window_bounds = array<i64: 8, 32>}, {pipeline_mode = #tpu.pipeline_mode<synchronous>, transform_indices = @transform_3, window_bounds = array<i64: 1024, 32>}, {pipeline_mode = #tpu.pipeline_mode<synchronous>, transform_indices = @transform_4, window_bounds = array<i64: 6, 32, 32>}, {pipeline_mode = #tpu.pipeline_mode<synchronous>, transform_indices = @transform_5, window_bounds = array<i64: 32, 1024>}, {pipeline_mode = #tpu.pipeline_mode<synchronous>, transform_indices = @transform_6, window_bounds = array<i64: 19, 32>}, {pipeline_mode = #tpu.pipeline_mode<synchronous>, transform_indices = @transform_7, window_bounds = array<i64: 1, 1024>}, {transform_indices = @transform_8, window_bounds = array<i64: 8, 1>}]} {
    %c0 = arith.constant 0 : index
    %0 = memref.load %arg1[%c0] : memref<3xf32, #tpu.memory_space<smem>>
    %c1 = arith.constant 1 : index
    %1 = memref.load %arg1[%c1] : memref<3xf32, #tpu.memory_space<smem>>
    %c2 = arith.constant 2 : index
    %2 = memref.load %arg1[%c2] : memref<3xf32, #tpu.memory_space<smem>>
    %c0_0 = arith.constant 0 : index
    %c0_1 = arith.constant 0 : index
    %3 = vector.load %arg2[%c0_0, %c0_1] : memref<8x1024xf32, #tpu.memory_space<vmem>>, vector<8x1024xf32>
    %cst = arith.constant 2.000000e+00 : f32
    %4 = vector.broadcast %cst : f32 to vector<8x1024xf32>
    %5 = arith.mulf %4, %3 : vector<8x1024xf32>
    %cst_2 = arith.constant 1.000000e+00 : f32
    %6 = vector.broadcast %cst_2 : f32 to vector<8x1024xf32>
    %7 = arith.subf %5, %6 : vector<8x1024xf32>
    %8 = arith.truncf %7 : vector<8x1024xf32> to vector<8x1024xbf16>
    %c0_3 = arith.constant 0 : index
    %c0_4 = arith.constant 0 : index
    %9 = vector.load %arg4[%c0_3, %c0_4] : memref<1024x32xbf16, #tpu.memory_space<vmem>>, vector<1024x32xbf16>
    %cst_5 = arith.constant dense<0.000000e+00> : vector<8x32xf32>
    %10 = tpu.matmul %8, %9, %cst_5 {dimension_numbers = #tpu.dot_dimension_numbers<[1], [0], [0], [1], [0, 0, 1, 1], [], []>} : vector<8x1024xbf16>, vector<1024x32xbf16>, vector<8x32xf32> -> vector<8x32xf32>
    %c0_6 = arith.constant 0 : index
    %c0_7 = arith.constant 0 : index
    %11 = vector.load %arg7[%c0_6, %c0_7] : memref<19x32xf32, #tpu.memory_space<vmem>>, vector<1x32xf32>
    %12 = vector.broadcast %11 : vector<1x32xf32> to vector<8x32xf32>
    %13 = arith.addf %10, %12 : vector<8x32xf32>
    %cst_8 = arith.constant dense<0.000000e+00> : vector<8xf32>
    %14 = vector.multi_reduction <add>, %13, %cst_8 [1] : vector<8x32xf32> to vector<8xf32>
    %15 = vector.shape_cast %14 : vector<8xf32> to vector<8x1xf32>
    %cst_9 = arith.constant 3.200000e+01 : f32
    %16 = vector.broadcast %cst_9 : f32 to vector<8x1xf32>
    %17 = arith.divf %15, %16 : vector<8x1xf32>
    %18 = vector.broadcast %17 : vector<8x1xf32> to vector<8x32xf32>
    %19 = arith.subf %13, %18 : vector<8x32xf32>
    %20 = arith.mulf %19, %19 : vector<8x32xf32>
    %cst_10 = arith.constant dense<0.000000e+00> : vector<8xf32>
    %21 = vector.multi_reduction <add>, %20, %cst_10 [1] : vector<8x32xf32> to vector<8xf32>
    %22 = vector.shape_cast %21 : vector<8xf32> to vector<8x1xf32>
    %cst_11 = arith.constant 3.200000e+01 : f32
    %23 = vector.broadcast %cst_11 : f32 to vector<8x1xf32>
    %24 = arith.divf %22, %23 : vector<8x1xf32>
    %25 = vector.broadcast %17 : vector<8x1xf32> to vector<8x32xf32>
    %26 = arith.subf %13, %25 : vector<8x32xf32>
    %cst_12 = arith.constant 9.99999974E-6 : f32
    %27 = vector.broadcast %cst_12 : f32 to vector<8x1xf32>
    %28 = arith.addf %24, %27 : vector<8x1xf32>
    %29 = math.rsqrt %28 : vector<8x1xf32>
    %30 = vector.broadcast %29 : vector<8x1xf32> to vector<8x32xf32>
    %31 = arith.mulf %26, %30 : vector<8x32xf32>
    %c1_13 = arith.constant 1 : index
    %c0_14 = arith.constant 0 : index
    %32 = vector.load %arg7[%c1_13, %c0_14] : memref<19x32xf32, #tpu.memory_space<vmem>>, vector<1x32xf32>
    %33 = vector.broadcast %32 : vector<1x32xf32> to vector<8x32xf32>
    %34 = arith.mulf %31, %33 : vector<8x32xf32>
    %c2_15 = arith.constant 2 : index
    %c0_16 = arith.constant 0 : index
    %35 = vector.load %arg7[%c2_15, %c0_16] : memref<19x32xf32, #tpu.memory_space<vmem>>, vector<1x32xf32>
    %36 = vector.broadcast %35 : vector<1x32xf32> to vector<8x32xf32>
    %37 = arith.addf %34, %36 : vector<8x32xf32>
    %cst_17 = arith.constant 0.000000e+00 : f32
    %38 = vector.broadcast %cst_17 : f32 to vector<8x32xf32>
    %39 = arith.maximumf %37, %38 : vector<8x32xf32>
    %40 = arith.truncf %39 : vector<8x32xf32> to vector<8x32xbf16>
    %c0_18 = arith.constant 0 : index
    %c0_19 = arith.constant 0 : index
    %c0_20 = arith.constant 0 : index
    %41 = vector.load %arg5[%c0_18, %c0_19, %c0_20] : memref<6x32x32xbf16, #tpu.memory_space<vmem>>, vector<1x32x32xbf16>
    %42 = vector.shape_cast %41 : vector<1x32x32xbf16> to vector<32x32xbf16>
    %cst_21 = arith.constant dense<0.000000e+00> : vector<8x32xf32>
    %43 = tpu.matmul %40, %42, %cst_21 {dimension_numbers = #tpu.dot_dimension_numbers<[1], [0], [0], [1], [0, 0, 1, 1], [], []>} : vector<8x32xbf16>, vector<32x32xbf16>, vector<8x32xf32> -> vector<8x32xf32>
    %c3 = arith.constant 3 : index
    %c0_22 = arith.constant 0 : index
    %44 = vector.load %arg7[%c3, %c0_22] : memref<19x32xf32, #tpu.memory_space<vmem>>, vector<1x32xf32>
    %45 = vector.broadcast %44 : vector<1x32xf32> to vector<8x32xf32>
    %46 = arith.addf %43, %45 : vector<8x32xf32>
    %cst_23 = arith.constant dense<0.000000e+00> : vector<8xf32>
    %47 = vector.multi_reduction <add>, %46, %cst_23 [1] : vector<8x32xf32> to vector<8xf32>
    %48 = vector.shape_cast %47 : vector<8xf32> to vector<8x1xf32>
    %cst_24 = arith.constant 3.200000e+01 : f32
    %49 = vector.broadcast %cst_24 : f32 to vector<8x1xf32>
    %50 = arith.divf %48, %49 : vector<8x1xf32>
    %51 = vector.broadcast %50 : vector<8x1xf32> to vector<8x32xf32>
    %52 = arith.subf %46, %51 : vector<8x32xf32>
    %53 = arith.mulf %52, %52 : vector<8x32xf32>
    %cst_25 = arith.constant dense<0.000000e+00> : vector<8xf32>
    %54 = vector.multi_reduction <add>, %53, %cst_25 [1] : vector<8x32xf32> to vector<8xf32>
    %55 = vector.shape_cast %54 : vector<8xf32> to vector<8x1xf32>
    %cst_26 = arith.constant 3.200000e+01 : f32
    %56 = vector.broadcast %cst_26 : f32 to vector<8x1xf32>
    %57 = arith.divf %55, %56 : vector<8x1xf32>
    %58 = vector.broadcast %50 : vector<8x1xf32> to vector<8x32xf32>
    %59 = arith.subf %46, %58 : vector<8x32xf32>
    %cst_27 = arith.constant 9.99999974E-6 : f32
    %60 = vector.broadcast %cst_27 : f32 to vector<8x1xf32>
    %61 = arith.addf %57, %60 : vector<8x1xf32>
    %62 = math.rsqrt %61 : vector<8x1xf32>
    %63 = vector.broadcast %62 : vector<8x1xf32> to vector<8x32xf32>
    %64 = arith.mulf %59, %63 : vector<8x32xf32>
    %c4 = arith.constant 4 : index
    %c0_28 = arith.constant 0 : index
    %65 = vector.load %arg7[%c4, %c0_28] : memref<19x32xf32, #tpu.memory_space<vmem>>, vector<1x32xf32>
    %66 = vector.broadcast %65 : vector<1x32xf32> to vector<8x32xf32>
    %67 = arith.mulf %64, %66 : vector<8x32xf32>
    %c5 = arith.constant 5 : index
    %c0_29 = arith.constant 0 : index
    %68 = vector.load %arg7[%c5, %c0_29] : memref<19x32xf32, #tpu.memory_space<vmem>>, vector<1x32xf32>
    %69 = vector.broadcast %68 : vector<1x32xf32> to vector<8x32xf32>
    %70 = arith.addf %67, %69 : vector<8x32xf32>
    %cst_30 = arith.constant 0.000000e+00 : f32
    %71 = vector.broadcast %cst_30 : f32 to vector<8x32xf32>
    %72 = arith.maximumf %70, %71 : vector<8x32xf32>
    %73 = arith.truncf %72 : vector<8x32xf32> to vector<8x32xbf16>
    %c1_31 = arith.constant 1 : index
    %c0_32 = arith.constant 0 : index
    %c0_33 = arith.constant 0 : index
    %74 = vector.load %arg5[%c1_31, %c0_32, %c0_33] : memref<6x32x32xbf16, #tpu.memory_space<vmem>>, vector<1x32x32xbf16>
    %75 = vector.shape_cast %74 : vector<1x32x32xbf16> to vector<32x32xbf16>
    %cst_34 = arith.constant dense<0.000000e+00> : vector<8x32xf32>
    %76 = tpu.matmul %73, %75, %cst_34 {dimension_numbers = #tpu.dot_dimension_numbers<[1], [0], [0], [1], [0, 0, 1, 1], [], []>} : vector<8x32xbf16>, vector<32x32xbf16>, vector<8x32xf32> -> vector<8x32xf32>
    %c6 = arith.constant 6 : index
    %c0_35 = arith.constant 0 : index
    %77 = vector.load %arg7[%c6, %c0_35] : memref<19x32xf32, #tpu.memory_space<vmem>>, vector<1x32xf32>
    %78 = vector.broadcast %77 : vector<1x32xf32> to vector<8x32xf32>
    %79 = arith.addf %76, %78 : vector<8x32xf32>
    %cst_36 = arith.constant dense<0.000000e+00> : vector<8xf32>
    %80 = vector.multi_reduction <add>, %79, %cst_36 [1] : vector<8x32xf32> to vector<8xf32>
    %81 = vector.shape_cast %80 : vector<8xf32> to vector<8x1xf32>
    %cst_37 = arith.constant 3.200000e+01 : f32
    %82 = vector.broadcast %cst_37 : f32 to vector<8x1xf32>
    %83 = arith.divf %81, %82 : vector<8x1xf32>
    %84 = vector.broadcast %83 : vector<8x1xf32> to vector<8x32xf32>
    %85 = arith.subf %79, %84 : vector<8x32xf32>
    %86 = arith.mulf %85, %85 : vector<8x32xf32>
    %cst_38 = arith.constant dense<0.000000e+00> : vector<8xf32>
    %87 = vector.multi_reduction <add>, %86, %cst_38 [1] : vector<8x32xf32> to vector<8xf32>
    %88 = vector.shape_cast %87 : vector<8xf32> to vector<8x1xf32>
    %cst_39 = arith.constant 3.200000e+01 : f32
    %89 = vector.broadcast %cst_39 : f32 to vector<8x1xf32>
    %90 = arith.divf %88, %89 : vector<8x1xf32>
    %91 = vector.broadcast %83 : vector<8x1xf32> to vector<8x32xf32>
    %92 = arith.subf %79, %91 : vector<8x32xf32>
    %cst_40 = arith.constant 9.99999974E-6 : f32
    %93 = vector.broadcast %cst_40 : f32 to vector<8x1xf32>
    %94 = arith.addf %90, %93 : vector<8x1xf32>
    %95 = math.rsqrt %94 : vector<8x1xf32>
    %96 = vector.broadcast %95 : vector<8x1xf32> to vector<8x32xf32>
    %97 = arith.mulf %92, %96 : vector<8x32xf32>
    %c7 = arith.constant 7 : index
    %c0_41 = arith.constant 0 : index
    %98 = vector.load %arg7[%c7, %c0_41] : memref<19x32xf32, #tpu.memory_space<vmem>>, vector<1x32xf32>
    %99 = vector.broadcast %98 : vector<1x32xf32> to vector<8x32xf32>
    %100 = arith.mulf %97, %99 : vector<8x32xf32>
    %c8 = arith.constant 8 : index
    %c0_42 = arith.constant 0 : index
    %101 = vector.load %arg7[%c8, %c0_42] : memref<19x32xf32, #tpu.memory_space<vmem>>, vector<1x32xf32>
    %102 = vector.broadcast %101 : vector<1x32xf32> to vector<8x32xf32>
    %103 = arith.addf %100, %102 : vector<8x32xf32>
    %cst_43 = arith.constant 0.000000e+00 : f32
    %104 = vector.broadcast %cst_43 : f32 to vector<8x32xf32>
    %105 = arith.maximumf %103, %104 : vector<8x32xf32>
    %106 = arith.truncf %105 : vector<8x32xf32> to vector<8x32xbf16>
    %c2_44 = arith.constant 2 : index
    %c0_45 = arith.constant 0 : index
    %c0_46 = arith.constant 0 : index
    %107 = vector.load %arg5[%c2_44, %c0_45, %c0_46] : memref<6x32x32xbf16, #tpu.memory_space<vmem>>, vector<1x32x32xbf16>
    %108 = vector.shape_cast %107 : vector<1x32x32xbf16> to vector<32x32xbf16>
    %cst_47 = arith.constant dense<0.000000e+00> : vector<8x32xf32>
    %109 = tpu.matmul %106, %108, %cst_47 {dimension_numbers = #tpu.dot_dimension_numbers<[1], [0], [0], [1], [0, 0, 1, 1], [], []>} : vector<8x32xbf16>, vector<32x32xbf16>, vector<8x32xf32> -> vector<8x32xf32>
    %c9 = arith.constant 9 : index
    %c0_48 = arith.constant 0 : index
    %110 = vector.load %arg7[%c9, %c0_48] : memref<19x32xf32, #tpu.memory_space<vmem>>, vector<1x32xf32>
    %111 = vector.broadcast %110 : vector<1x32xf32> to vector<8x32xf32>
    %112 = arith.addf %109, %111 : vector<8x32xf32>
    %c0_49 = arith.constant 0 : index
    %c0_50 = arith.constant 0 : index
    %113 = vector.load %arg3[%c0_49, %c0_50] : memref<8x32xf32, #tpu.memory_space<vmem>>, vector<8x32xf32>
    %cst_51 = arith.constant 5.000000e-02 : f32
    %114 = vector.broadcast %cst_51 : f32 to vector<8x32xf32>
    %115 = arith.mulf %114, %113 : vector<8x32xf32>
    %116 = arith.addf %112, %115 : vector<8x32xf32>
    %117 = arith.truncf %116 : vector<8x32xf32> to vector<8x32xbf16>
    %c3_52 = arith.constant 3 : index
    %c0_53 = arith.constant 0 : index
    %c0_54 = arith.constant 0 : index
    %118 = vector.load %arg5[%c3_52, %c0_53, %c0_54] : memref<6x32x32xbf16, #tpu.memory_space<vmem>>, vector<1x32x32xbf16>
    %119 = vector.shape_cast %118 : vector<1x32x32xbf16> to vector<32x32xbf16>
    %cst_55 = arith.constant dense<0.000000e+00> : vector<8x32xf32>
    %120 = tpu.matmul %117, %119, %cst_55 {dimension_numbers = #tpu.dot_dimension_numbers<[1], [0], [0], [1], [0, 0, 1, 1], [], []>} : vector<8x32xbf16>, vector<32x32xbf16>, vector<8x32xf32> -> vector<8x32xf32>
    %c10 = arith.constant 10 : index
    %c0_56 = arith.constant 0 : index
    %121 = vector.load %arg7[%c10, %c0_56] : memref<19x32xf32, #tpu.memory_space<vmem>>, vector<1x32xf32>
    %122 = vector.broadcast %121 : vector<1x32xf32> to vector<8x32xf32>
    %123 = arith.addf %120, %122 : vector<8x32xf32>
    %cst_57 = arith.constant dense<0.000000e+00> : vector<8xf32>
    %124 = vector.multi_reduction <add>, %123, %cst_57 [1] : vector<8x32xf32> to vector<8xf32>
    %125 = vector.shape_cast %124 : vector<8xf32> to vector<8x1xf32>
    %cst_58 = arith.constant 3.200000e+01 : f32
    %126 = vector.broadcast %cst_58 : f32 to vector<8x1xf32>
    %127 = arith.divf %125, %126 : vector<8x1xf32>
    %128 = vector.broadcast %127 : vector<8x1xf32> to vector<8x32xf32>
    %129 = arith.subf %123, %128 : vector<8x32xf32>
    %130 = arith.mulf %129, %129 : vector<8x32xf32>
    %cst_59 = arith.constant dense<0.000000e+00> : vector<8xf32>
    %131 = vector.multi_reduction <add>, %130, %cst_59 [1] : vector<8x32xf32> to vector<8xf32>
    %132 = vector.shape_cast %131 : vector<8xf32> to vector<8x1xf32>
    %cst_60 = arith.constant 3.200000e+01 : f32
    %133 = vector.broadcast %cst_60 : f32 to vector<8x1xf32>
    %134 = arith.divf %132, %133 : vector<8x1xf32>
    %135 = vector.broadcast %127 : vector<8x1xf32> to vector<8x32xf32>
    %136 = arith.subf %123, %135 : vector<8x32xf32>
    %cst_61 = arith.constant 9.99999974E-6 : f32
    %137 = vector.broadcast %cst_61 : f32 to vector<8x1xf32>
    %138 = arith.addf %134, %137 : vector<8x1xf32>
    %139 = math.rsqrt %138 : vector<8x1xf32>
    %140 = vector.broadcast %139 : vector<8x1xf32> to vector<8x32xf32>
    %141 = arith.mulf %136, %140 : vector<8x32xf32>
    %c11 = arith.constant 11 : index
    %c0_62 = arith.constant 0 : index
    %142 = vector.load %arg7[%c11, %c0_62] : memref<19x32xf32, #tpu.memory_space<vmem>>, vector<1x32xf32>
    %143 = vector.broadcast %142 : vector<1x32xf32> to vector<8x32xf32>
    %144 = arith.mulf %141, %143 : vector<8x32xf32>
    %c12 = arith.constant 12 : index
    %c0_63 = arith.constant 0 : index
    %145 = vector.load %arg7[%c12, %c0_63] : memref<19x32xf32, #tpu.memory_space<vmem>>, vector<1x32xf32>
    %146 = vector.broadcast %145 : vector<1x32xf32> to vector<8x32xf32>
    %147 = arith.addf %144, %146 : vector<8x32xf32>
    %cst_64 = arith.constant 0.000000e+00 : f32
    %148 = vector.broadcast %cst_64 : f32 to vector<8x32xf32>
    %149 = arith.maximumf %147, %148 : vector<8x32xf32>
    %150 = arith.truncf %149 : vector<8x32xf32> to vector<8x32xbf16>
    %c4_65 = arith.constant 4 : index
    %c0_66 = arith.constant 0 : index
    %c0_67 = arith.constant 0 : index
    %151 = vector.load %arg5[%c4_65, %c0_66, %c0_67] : memref<6x32x32xbf16, #tpu.memory_space<vmem>>, vector<1x32x32xbf16>
    %152 = vector.shape_cast %151 : vector<1x32x32xbf16> to vector<32x32xbf16>
    %cst_68 = arith.constant dense<0.000000e+00> : vector<8x32xf32>
    %153 = tpu.matmul %150, %152, %cst_68 {dimension_numbers = #tpu.dot_dimension_numbers<[1], [0], [0], [1], [0, 0, 1, 1], [], []>} : vector<8x32xbf16>, vector<32x32xbf16>, vector<8x32xf32> -> vector<8x32xf32>
    %c13 = arith.constant 13 : index
    %c0_69 = arith.constant 0 : index
    %154 = vector.load %arg7[%c13, %c0_69] : memref<19x32xf32, #tpu.memory_space<vmem>>, vector<1x32xf32>
    %155 = vector.broadcast %154 : vector<1x32xf32> to vector<8x32xf32>
    %156 = arith.addf %153, %155 : vector<8x32xf32>
    %cst_70 = arith.constant dense<0.000000e+00> : vector<8xf32>
    %157 = vector.multi_reduction <add>, %156, %cst_70 [1] : vector<8x32xf32> to vector<8xf32>
    %158 = vector.shape_cast %157 : vector<8xf32> to vector<8x1xf32>
    %cst_71 = arith.constant 3.200000e+01 : f32
    %159 = vector.broadcast %cst_71 : f32 to vector<8x1xf32>
    %160 = arith.divf %158, %159 : vector<8x1xf32>
    %161 = vector.broadcast %160 : vector<8x1xf32> to vector<8x32xf32>
    %162 = arith.subf %156, %161 : vector<8x32xf32>
    %163 = arith.mulf %162, %162 : vector<8x32xf32>
    %cst_72 = arith.constant dense<0.000000e+00> : vector<8xf32>
    %164 = vector.multi_reduction <add>, %163, %cst_72 [1] : vector<8x32xf32> to vector<8xf32>
    %165 = vector.shape_cast %164 : vector<8xf32> to vector<8x1xf32>
    %cst_73 = arith.constant 3.200000e+01 : f32
    %166 = vector.broadcast %cst_73 : f32 to vector<8x1xf32>
    %167 = arith.divf %165, %166 : vector<8x1xf32>
    %168 = vector.broadcast %160 : vector<8x1xf32> to vector<8x32xf32>
    %169 = arith.subf %156, %168 : vector<8x32xf32>
    %cst_74 = arith.constant 9.99999974E-6 : f32
    %170 = vector.broadcast %cst_74 : f32 to vector<8x1xf32>
    %171 = arith.addf %167, %170 : vector<8x1xf32>
    %172 = math.rsqrt %171 : vector<8x1xf32>
    %173 = vector.broadcast %172 : vector<8x1xf32> to vector<8x32xf32>
    %174 = arith.mulf %169, %173 : vector<8x32xf32>
    %c14 = arith.constant 14 : index
    %c0_75 = arith.constant 0 : index
    %175 = vector.load %arg7[%c14, %c0_75] : memref<19x32xf32, #tpu.memory_space<vmem>>, vector<1x32xf32>
    %176 = vector.broadcast %175 : vector<1x32xf32> to vector<8x32xf32>
    %177 = arith.mulf %174, %176 : vector<8x32xf32>
    %c15 = arith.constant 15 : index
    %c0_76 = arith.constant 0 : index
    %178 = vector.load %arg7[%c15, %c0_76] : memref<19x32xf32, #tpu.memory_space<vmem>>, vector<1x32xf32>
    %179 = vector.broadcast %178 : vector<1x32xf32> to vector<8x32xf32>
    %180 = arith.addf %177, %179 : vector<8x32xf32>
    %cst_77 = arith.constant 0.000000e+00 : f32
    %181 = vector.broadcast %cst_77 : f32 to vector<8x32xf32>
    %182 = arith.maximumf %180, %181 : vector<8x32xf32>
    %183 = arith.truncf %182 : vector<8x32xf32> to vector<8x32xbf16>
    %c5_78 = arith.constant 5 : index
    %c0_79 = arith.constant 0 : index
    %c0_80 = arith.constant 0 : index
    %184 = vector.load %arg5[%c5_78, %c0_79, %c0_80] : memref<6x32x32xbf16, #tpu.memory_space<vmem>>, vector<1x32x32xbf16>
    %185 = vector.shape_cast %184 : vector<1x32x32xbf16> to vector<32x32xbf16>
    %cst_81 = arith.constant dense<0.000000e+00> : vector<8x32xf32>
    %186 = tpu.matmul %183, %185, %cst_81 {dimension_numbers = #tpu.dot_dimension_numbers<[1], [0], [0], [1], [0, 0, 1, 1], [], []>} : vector<8x32xbf16>, vector<32x32xbf16>, vector<8x32xf32> -> vector<8x32xf32>
    %c16 = arith.constant 16 : index
    %c0_82 = arith.constant 0 : index
    %187 = vector.load %arg7[%c16, %c0_82] : memref<19x32xf32, #tpu.memory_space<vmem>>, vector<1x32xf32>
    %188 = vector.broadcast %187 : vector<1x32xf32> to vector<8x32xf32>
    %189 = arith.addf %186, %188 : vector<8x32xf32>
    %cst_83 = arith.constant dense<0.000000e+00> : vector<8xf32>
    %190 = vector.multi_reduction <add>, %189, %cst_83 [1] : vector<8x32xf32> to vector<8xf32>
    %191 = vector.shape_cast %190 : vector<8xf32> to vector<8x1xf32>
    %cst_84 = arith.constant 3.200000e+01 : f32
    %192 = vector.broadcast %cst_84 : f32 to vector<8x1xf32>
    %193 = arith.divf %191, %192 : vector<8x1xf32>
    %194 = vector.broadcast %193 : vector<8x1xf32> to vector<8x32xf32>
    %195 = arith.subf %189, %194 : vector<8x32xf32>
    %196 = arith.mulf %195, %195 : vector<8x32xf32>
    %cst_85 = arith.constant dense<0.000000e+00> : vector<8xf32>
    %197 = vector.multi_reduction <add>, %196, %cst_85 [1] : vector<8x32xf32> to vector<8xf32>
    %198 = vector.shape_cast %197 : vector<8xf32> to vector<8x1xf32>
    %cst_86 = arith.constant 3.200000e+01 : f32
    %199 = vector.broadcast %cst_86 : f32 to vector<8x1xf32>
    %200 = arith.divf %198, %199 : vector<8x1xf32>
    %201 = vector.broadcast %193 : vector<8x1xf32> to vector<8x32xf32>
    %202 = arith.subf %189, %201 : vector<8x32xf32>
    %cst_87 = arith.constant 9.99999974E-6 : f32
    %203 = vector.broadcast %cst_87 : f32 to vector<8x1xf32>
    %204 = arith.addf %200, %203 : vector<8x1xf32>
    %205 = math.rsqrt %204 : vector<8x1xf32>
    %206 = vector.broadcast %205 : vector<8x1xf32> to vector<8x32xf32>
    %207 = arith.mulf %202, %206 : vector<8x32xf32>
    %c17 = arith.constant 17 : index
    %c0_88 = arith.constant 0 : index
    %208 = vector.load %arg7[%c17, %c0_88] : memref<19x32xf32, #tpu.memory_space<vmem>>, vector<1x32xf32>
    %209 = vector.broadcast %208 : vector<1x32xf32> to vector<8x32xf32>
    %210 = arith.mulf %207, %209 : vector<8x32xf32>
    %c18 = arith.constant 18 : index
    %c0_89 = arith.constant 0 : index
    %211 = vector.load %arg7[%c18, %c0_89] : memref<19x32xf32, #tpu.memory_space<vmem>>, vector<1x32xf32>
    %212 = vector.broadcast %211 : vector<1x32xf32> to vector<8x32xf32>
    %213 = arith.addf %210, %212 : vector<8x32xf32>
    %cst_90 = arith.constant 0.000000e+00 : f32
    %214 = vector.broadcast %cst_90 : f32 to vector<8x32xf32>
    %215 = arith.maximumf %213, %214 : vector<8x32xf32>
    %216 = arith.truncf %215 : vector<8x32xf32> to vector<8x32xbf16>
    %c0_91 = arith.constant 0 : index
    %c0_92 = arith.constant 0 : index
    %217 = vector.load %arg6[%c0_91, %c0_92] : memref<32x1024xbf16, #tpu.memory_space<vmem>>, vector<32x1024xbf16>
    %cst_93 = arith.constant dense<0.000000e+00> : vector<8x1024xf32>
    %218 = tpu.matmul %216, %217, %cst_93 {dimension_numbers = #tpu.dot_dimension_numbers<[1], [0], [0], [1], [0, 0, 1, 1], [], []>} : vector<8x32xbf16>, vector<32x1024xbf16>, vector<8x1024xf32> -> vector<8x1024xf32>
    %c0_94 = arith.constant 0 : index
    %c0_95 = arith.constant 0 : index
    %219 = vector.load %arg8[%c0_94, %c0_95] : memref<1x1024xf32, #tpu.memory_space<vmem>>, vector<1x1024xf32>
    %220 = vector.broadcast %219 : vector<1x1024xf32> to vector<8x1024xf32>
    %221 = arith.addf %218, %220 : vector<8x1024xf32>
    %c0_96 = arith.constant 0 : index
    %c0_97 = arith.constant 0 : index
    %222 = vector.load %arg2[%c0_96, %c0_97] : memref<8x1024xf32, #tpu.memory_space<vmem>>, vector<8x1024xf32>
    %cst_98 = arith.constant 2.000000e+00 : f32
    %223 = vector.broadcast %cst_98 : f32 to vector<8x1024xf32>
    %224 = arith.mulf %223, %222 : vector<8x1024xf32>
    %cst_99 = arith.constant 1.000000e+00 : f32
    %225 = vector.broadcast %cst_99 : f32 to vector<8x1024xf32>
    %226 = arith.subf %224, %225 : vector<8x1024xf32>
    %cst_100 = arith.constant 0.00392156886 : f32
    %227 = vector.broadcast %cst_100 : f32 to vector<8x1024xf32>
    %228 = arith.subf %226, %227 : vector<8x1024xf32>
    %229 = arith.subf %228, %221 : vector<8x1024xf32>
    %230 = vector.broadcast %0 : f32 to vector<8x1024xf32>
    %231 = arith.mulf %229, %230 : vector<8x1024xf32>
    %cst_101 = arith.constant -8.700000e+01 : f32
    %232 = vector.broadcast %cst_101 : f32 to vector<8x1024xf32>
    %233 = arith.maximumf %231, %232 : vector<8x1024xf32>
    %cst_102 = arith.constant 0.000000e+00 : f32
    %234 = vector.broadcast %cst_102 : f32 to vector<8x1024xf32>
    %235 = arith.subf %234, %233 : vector<8x1024xf32>
    %236 = math.exp %235 : vector<8x1024xf32>
    %cst_103 = arith.constant 1.000000e+00 : f32
    %237 = vector.broadcast %cst_103 : f32 to vector<8x1024xf32>
    %238 = arith.addf %237, %236 : vector<8x1024xf32>
    %239 = vector.broadcast %2 : f32 to vector<8x1024xf32>
    %240 = arith.mulf %236, %239 : vector<8x1024xf32>
    %cst_104 = arith.constant 1.000000e+00 : f32
    %241 = vector.broadcast %cst_104 : f32 to vector<8x1024xf32>
    %242 = arith.addf %241, %240 : vector<8x1024xf32>
    %cst_105 = arith.constant 0.00392156886 : f32
    %243 = vector.broadcast %cst_105 : f32 to vector<8x1024xf32>
    %244 = arith.addf %226, %243 : vector<8x1024xf32>
    %cst_106 = arith.constant 1.000000e+00 : f32
    %245 = vector.broadcast %cst_106 : f32 to vector<8x1024xf32>
    %246 = arith.cmpf ogt, %244, %245 : vector<8x1024xf32>
    %cst_107 = arith.constant 0.00392156886 : f32
    %247 = vector.broadcast %cst_107 : f32 to vector<8x1024xf32>
    %248 = arith.subf %226, %247 : vector<8x1024xf32>
    %cst_108 = arith.constant -1.000000e+00 : f32
    %249 = vector.broadcast %cst_108 : f32 to vector<8x1024xf32>
    %250 = arith.cmpf olt, %248, %249 : vector<8x1024xf32>
    %251 = arith.mulf %238, %242 : vector<8x1024xf32>
    %252 = arith.select %246, %238, %251 : vector<8x1024xi1>, vector<8x1024xf32>
    %253 = arith.select %250, %242, %252 : vector<8x1024xi1>, vector<8x1024xf32>
    %254 = vector.broadcast %1 : f32 to vector<8x1024xf32>
    %255 = arith.addf %231, %254 : vector<8x1024xf32>
    %256 = arith.select %246, %233, %255 : vector<8x1024xi1>, vector<8x1024xf32>
    %cst_109 = arith.constant 0.000000e+00 : f32
    %257 = vector.broadcast %cst_109 : f32 to vector<8x1024xf32>
    %258 = arith.select %250, %257, %256 : vector<8x1024xi1>, vector<8x1024xf32>
    %259 = arith.ori %250, %246 : vector<8x1024xi1>
    %cst_110 = arith.constant 0x7F800000 : f32
    %cst_111 = arith.constant 15.9423847 : f32
    %260 = vector.broadcast %cst_110 : f32 to vector<8x1024xf32>
    %261 = vector.broadcast %cst_111 : f32 to vector<8x1024xf32>
    %262 = arith.select %259, %260, %261 : vector<8x1024xi1>, vector<8x1024xf32>
    %263 = math.log %253 : vector<8x1024xf32>
    %264 = arith.addf %258, %263 : vector<8x1024xf32>
    %265 = arith.minimumf %264, %262 : vector<8x1024xf32>
    %cst_112 = arith.constant 0.000000e+00 : f32
    %266 = vector.broadcast %cst_112 : f32 to vector<8x1024xf32>
    %267 = arith.maximumf %265, %266 : vector<8x1024xf32>
    %cst_113 = arith.constant dense<0.000000e+00> : vector<8xf32>
    %268 = vector.multi_reduction <add>, %267, %cst_113 [1] : vector<8x1024xf32> to vector<8xf32>
    %269 = vector.shape_cast %268 : vector<8xf32> to vector<8x1xf32>
    %270 = arith.mulf %112, %112 : vector<8x32xf32>
    %cst_114 = arith.constant dense<0.000000e+00> : vector<8xf32>
    %271 = vector.multi_reduction <add>, %270, %cst_114 [1] : vector<8x32xf32> to vector<8xf32>
    %272 = vector.shape_cast %271 : vector<8xf32> to vector<8x1xf32>
    %cst_115 = arith.constant 5.000000e-01 : f32
    %273 = vector.broadcast %cst_115 : f32 to vector<8x1xf32>
    %274 = arith.mulf %273, %272 : vector<8x1xf32>
    %cst_116 = arith.constant 19.9758587 : f32
    %275 = vector.broadcast %cst_116 : f32 to vector<8x1xf32>
    %276 = arith.addf %275, %274 : vector<8x1xf32>
    %277 = arith.addf %269, %276 : vector<8x1xf32>
    %c0_117 = arith.constant 0 : index
    %c0_118 = arith.constant 0 : index
    %278 = vector.load %arg9[%c0_117, %c0_118] : memref<8x1xf32, #tpu.memory_space<vmem>>, vector<8x1xf32>
    tpu.vector_store %arg9[%c0_117, %c0_118], %277 {strides = array<i32>} : memref<8x1xf32, #tpu.memory_space<vmem>>, vector<8x1xf32>,
    return
  }
  func.func @transform_0(%arg0: i32) -> i32 {
    %c0_i32 = arith.constant 0 : i32
    %c0_i32_0 = arith.constant 0 : i32
    return %c0_i32 : i32
  }
  func.func @transform_1(%arg0: i32) -> (i32, i32) {
    %c0_i32 = arith.constant 0 : i32
    %c0_i32_0 = arith.constant 0 : i32
    return %arg0, %c0_i32 : i32, i32
  }
  func.func @transform_2(%arg0: i32) -> (i32, i32) {
    %c0_i32 = arith.constant 0 : i32
    %c0_i32_0 = arith.constant 0 : i32
    return %arg0, %c0_i32 : i32, i32
  }
  func.func @transform_3(%arg0: i32) -> (i32, i32) {
    %c0_i32 = arith.constant 0 : i32
    %c0_i32_0 = arith.constant 0 : i32
    %c0_i32_1 = arith.constant 0 : i32
    return %c0_i32, %c0_i32_0 : i32, i32
  }
  func.func @transform_4(%arg0: i32) -> (i32, i32, i32) {
    %c0_i32 = arith.constant 0 : i32
    %c0_i32_0 = arith.constant 0 : i32
    %c0_i32_1 = arith.constant 0 : i32
    %c0_i32_2 = arith.constant 0 : i32
    return %c0_i32, %c0_i32_0, %c0_i32_1 : i32, i32, i32
  }
  func.func @transform_5(%arg0: i32) -> (i32, i32) {
    %c0_i32 = arith.constant 0 : i32
    %c0_i32_0 = arith.constant 0 : i32
    %c0_i32_1 = arith.constant 0 : i32
    return %c0_i32, %c0_i32_0 : i32, i32
  }
  func.func @transform_6(%arg0: i32) -> (i32, i32) {
    %c0_i32 = arith.constant 0 : i32
    %c0_i32_0 = arith.constant 0 : i32
    %c0_i32_1 = arith.constant 0 : i32
    return %c0_i32, %c0_i32_0 : i32, i32
  }
  func.func @transform_7(%arg0: i32) -> (i32, i32) {
    %c0_i32 = arith.constant 0 : i32
    %c0_i32_0 = arith.constant 0 : i32
    %c0_i32_1 = arith.constant 0 : i32
    return %c0_i32, %c0_i32_0 : i32, i32
  }
  func.func @transform_8(%arg0: i32) -> (i32, i32) {
    %c0_i32 = arith.constant 0 : i32
    %c0_i32_0 = arith.constant 0 : i32
    return %arg0, %c0_i32 : i32, i32
  }
}

</mosaic_0001>

<llo_original>
// kernel: lae_forward_eval.1
$region0: #{lae_forward_eval.1}
  #allocation0 [shape = 'u32[]', space=smem, size = 0x4, offset = 0x4, fixed_abs, tag = 'smem constant byte address 0x4 - core index']
  #allocation1 [shape = 'u32[72,128]{1,0:T(1,128)}', space=vmem, size = 0x9000, scoped, tag = 'internal scratch']
  %s0 = inlined_call_operand.vmem [shape: f32[3], index: 0, kind: input, shape index: {}]
  %s1 = inlined_call_operand.vmem [shape: f32[2,1024], index: 1, kind: input, shape index: {}]
  %s2 = inlined_call_operand.vmem [shape: f32[2,32], index: 2, kind: input, shape index: {}]
  %s3 = inlined_call_operand.vmem [shape: bf16[1024,32], index: 3, kind: input, shape index: {}]
  %s4 = inlined_call_operand.vmem [shape: bf16[6,32,32], index: 4, kind: input, shape index: {}]
  %s5 = inlined_call_operand.vmem [shape: bf16[32,1024], index: 5, kind: input, shape index: {}]
  %s6 = inlined_call_operand.vmem [shape: f32[19,32], index: 6, kind: input, shape index: {}]
  %s7 = inlined_call_operand.vmem [shape: f32[1,1024], index: 7, kind: input, shape index: {}]
  %s8 = inlined_call_operand.vmem [shape: f32[2,1], index: 8, kind: output, shape index: {}]
  %s9 = sld [smem:[#allocation0]]
  $region76: #{lae_forward_eval.1} parent=0
    _
  %s11 = ssub.s32 1, %s9
  %s12 = scalar_select 0, %s11, %s9
  $region1: #{lae_forward_eval.1} parent=0
    #allocation2 [shape = 'u8[512]{0}', space=smem, size = 0x200, scoped, tag = 'input window, operand 0, single buffered']
    #allocation3 [shape = 's32[1]{0}', space=sflag, size = 0x4, scoped, tag = 'scoped memory for lae_forward_eval.1']
    #allocation4 [shape = 'u8[4096]{0}', space=vmem, size = 0x1000, scoped, tag = 'output window, operand 0, single buffered']
    %13 = vsyncpa [#allocation3], 0
    // Predicated region
    $region2: #{lae_forward_eval.1} parent=1 // pred_check
      _
    $region3: #{lae_forward_eval.1} parent=1 // pred_check_branch
      %15 = sbr.rel (0) target = $region5
    $region4: #{lae_forward_eval.1} parent=1 // pred_region
      %17 = vsyncadd [#allocation3], 0
      %s19 = sshll.u32 %s0, 4
      %s20 = int_to_ptr.vmem [resolvable:$true] %s19
      %22 = dma.vmem_to_smem %s20, 16, [#allocation2], [#allocation3]
    $region5: #{lae_forward_eval.1} parent=1 // pred_fallthru
      _
    // Predicated region
    $region6: #{lae_forward_eval.1} parent=1 // pred_check
      _
    $region7: #{lae_forward_eval.1} parent=1 // pred_check_branch
      %24 = sbr.rel (0) target = $region9
    $region8: #{lae_forward_eval.1} parent=1 // pred_region
      _
    $region9: #{lae_forward_eval.1} parent=1 // pred_fallthru
      _
    // Predicated region
    $region10: #{lae_forward_eval.1} parent=1 // pred_check
      _
    $region11: #{lae_forward_eval.1} parent=1 // pred_check_branch
      %26 = sbr.rel (0) target = $region13
    $region12: #{lae_forward_eval.1} parent=1 // pred_region
      _
    $region13: #{lae_forward_eval.1} parent=1 // pred_fallthru
      _
    // Predicated region
    $region14: #{lae_forward_eval.1} parent=1 // pred_check
      _
    $region15: #{lae_forward_eval.1} parent=1 // pred_check_branch
      %28 = sbr.rel (0) target = $region17
    $region16: #{lae_forward_eval.1} parent=1 // pred_region
      _
    $region17: #{lae_forward_eval.1} parent=1 // pred_fallthru
      _
    // Predicated region
    $region18: #{lae_forward_eval.1} parent=1 // pred_check
      _
    $region19: #{lae_forward_eval.1} parent=1 // pred_check_branch
      %30 = sbr.rel (0) target = $region21
    $region20: #{lae_forward_eval.1} parent=1 // pred_region
      _
    $region21: #{lae_forward_eval.1} parent=1 // pred_fallthru
      _
    // Predicated region
    $region22: #{lae_forward_eval.1} parent=1 // pred_check
      _
    $region23: #{lae_forward_eval.1} parent=1 // pred_check_branch
      %32 = sbr.rel (0) target = $region25
    $region24: #{lae_forward_eval.1} parent=1 // pred_region
      _
    $region25: #{lae_forward_eval.1} parent=1 // pred_fallthru
      _
    // Predicated region
    $region26: #{lae_forward_eval.1} parent=1 // pred_check
      _
    $region27: #{lae_forward_eval.1} parent=1 // pred_check_branch
      %34 = sbr.rel (0) target = $region29
    $region28: #{lae_forward_eval.1} parent=1 // pred_region
      _
    $region29: #{lae_forward_eval.1} parent=1 // pred_fallthru
      _
    // Predicated region
    $region30: #{lae_forward_eval.1} parent=1 // pred_check
      _
    $region31: #{lae_forward_eval.1} parent=1 // pred_check_branch
      %36 = sbr.rel (0) target = $region33
    $region32: #{lae_forward_eval.1} parent=1 // pred_region
      _
    $region33: #{lae_forward_eval.1} parent=1 // pred_fallthru
      _
    // Predicated region
    $region34: #{lae_forward_eval.1} parent=1 // pred_check
      _
    $region35: #{lae_forward_eval.1} parent=1 // pred_check_branch
      %38 = sbr.rel (0) target = $region37
    $region36: #{lae_forward_eval.1} parent=1 // pred_region
      %40 = dma.done [#allocation3], 16
    $region37: #{lae_forward_eval.1} parent=1 // pred_fallthru
      _
    %41 = sfence
    %s43 = sld [smem:[#allocation2]]
    %s44 = sld [smem:[#allocation2 + $0x1]]
    %s45 = sld [smem:[#allocation2 + $0x2]]
    %v46 = vld [vmem:[%s1] sm:$0xff]
    %v47 = vld [vmem:[%s1 + $0x8] sm:$0xff]
    %v48 = vld [vmem:[%s1 + $0x10] sm:$0xff]
    %v49 = vld [vmem:[%s1 + $0x18] sm:$0xff]
    %v50 = vld [vmem:[%s1 + $0x20] sm:$0xff]
    %v51 = vld [vmem:[%s1 + $0x28] sm:$0xff]
    %v52 = vld [vmem:[%s1 + $0x30] sm:$0xff]
    %v53 = vld [vmem:[%s1 + $0x38] sm:$0xff]
    %v54 = vmul.f32 %v46, 2.0
    %v55 = vmul.f32 %v47, 2.0
    %v56 = vmul.f32 %v48, 2.0
    %v57 = vmul.f32 %v49, 2.0
    %v58 = vmul.f32 %v50, 2.0
    %v59 = vmul.f32 %v51, 2.0
    %v60 = vmul.f32 %v52, 2.0
    %v61 = vmul.f32 %v53, 2.0
    %v62 = vsub.f32 %v54, 1.0
    %v63 = vsub.f32 %v55, 1.0
    %v64 = vsub.f32 %v56, 1.0
    %v65 = vsub.f32 %v57, 1.0
    %v66 = vsub.f32 %v58, 1.0
    %v67 = vsub.f32 %v59, 1.0
    %v68 = vsub.f32 %v60, 1.0
    %v69 = vsub.f32 %v61, 1.0
    %78 = vst [vmem:[#allocation1] ss:$4 sm:$0xff] %v62
    %s79 = scalar_lea.vmem [#allocation1], 1
    %80 = vst [vmem:[%s79] ss:$4 sm:$0xff] %v64
    %s81 = scalar_lea.vmem [#allocation1], 2
    %82 = vst [vmem:[%s81] ss:$4 sm:$0xff] %v66
    %s83 = scalar_lea.vmem [#allocation1], 3
    %84 = vst [vmem:[%s83] ss:$4 sm:$0xff] %v68
    %s85 = scalar_lea.vmem [#allocation1], 32
    %86 = vst [vmem:[%s85] ss:$4 sm:$0xff] %v63
    %s87 = scalar_lea.vmem [#allocation1], 33
    %88 = vst [vmem:[%s87] ss:$4 sm:$0xff] %v65
    %s89 = scalar_lea.vmem [#allocation1], 34
    %90 = vst [vmem:[%s89] ss:$4 sm:$0xff] %v67
    %s91 = scalar_lea.vmem [#allocation1], 35
    %92 = vst [vmem:[%s91] ss:$4 sm:$0xff] %v69
    %v93 = vld.sshfl [vmem:[#allocation1] sm:$0xff pattern:$0x73625140]
    %v94 = vld.sshfl [vmem:[#allocation1 + $0x8] sm:$0xff pattern:$0x73625140]
    %v95 = vld.sshfl [vmem:[#allocation1 + $0x10] sm:$0xff pattern:$0x73625140]
    %v96 = vld.sshfl [vmem:[#allocation1 + $0x18] sm:$0xff pattern:$0x73625140]
    %v97 = vld.sshfl [vmem:[#allocation1 + $0x20] sm:$0xff pattern:$0x73625140]
    %v98 = vld.sshfl [vmem:[#allocation1 + $0x28] sm:$0xff pattern:$0x73625140]
    %v99 = vld.sshfl [vmem:[#allocation1 + $0x30] sm:$0xff pattern:$0x73625140]
    %v100 = vld.sshfl [vmem:[#allocation1 + $0x38] sm:$0xff pattern:$0x73625140]
    %v109 = vpack.c.bf16 %v93, %v93
    %v110 = vpack.c.bf16 %v94, %v94
    %v111 = vpack.c.bf16 %v95, %v95
    %v112 = vpack.c.bf16 %v96, %v96
    %v113 = vpack.c.bf16 %v97, %v97
    %v114 = vpack.c.bf16 %v98, %v98
    %v115 = vpack.c.bf16 %v99, %v99
    %v116 = vpack.c.bf16 %v100, %v100
    %v117 = vld [vmem:[%s3] sm:$0xf]
    %v118 = vld [vmem:[%s3 + $0x4] sm:$0xf]
    %v119 = vld [vmem:[%s3 + $0x8] sm:$0xf]
    %v120 = vld [vmem:[%s3 + $0xc] sm:$0xf]
    %v121 = vld [vmem:[%s3 + $0x10] sm:$0xf]
    %v122 = vld [vmem:[%s3 + $0x14] sm:$0xf]
    %v123 = vld [vmem:[%s3 + $0x18] sm:$0xf]
    %v124 = vld [vmem:[%s3 + $0x1c] sm:$0xf]
    %v125 = vld [vmem:[%s3 + $0x20] sm:$0xf]
    %v126 = vld [vmem:[%s3 + $0x24] sm:$0xf]
    %v127 = vld [vmem:[%s3 + $0x28] sm:$0xf]
    %v128 = vld [vmem:[%s3 + $0x2c] sm:$0xf]
    %v129 = vld [vmem:[%s3 + $0x30] sm:$0xf]
    %v130 = vld [vmem:[%s3 + $0x34] sm:$0xf]
    %v131 = vld [vmem:[%s3 + $0x38] sm:$0xf]
    %v132 = vld [vmem:[%s3 + $0x3c] sm:$0xf]
    %v133 = vld [vmem:[%s3 + $0x40] sm:$0xf]
    %v134 = vld [vmem:[%s3 + $0x44] sm:$0xf]
    %v135 = vld [vmem:[%s3 + $0x48] sm:$0xf]
    %v136 = vld [vmem:[%s3 + $0x4c] sm:$0xf]
    %v137 = vld [vmem:[%s3 + $0x50] sm:$0xf]
    %v138 = vld [vmem:[%s3 + $0x54] sm:$0xf]
    %v139 = vld [vmem:[%s3 + $0x58] sm:$0xf]
    %v140 = vld [vmem:[%s3 + $0x5c] sm:$0xf]
    %v141 = vld [vmem:[%s3 + $0x60] sm:$0xf]
    %v142 = vld [vmem:[%s3 + $0x64] sm:$0xf]
    %v143 = vld [vmem:[%s3 + $0x68] sm:$0xf]
    %v144 = vld [vmem:[%s3 + $0x6c] sm:$0xf]
    %v145 = vld [vmem:[%s3 + $0x70] sm:$0xf]
    %v146 = vld [vmem:[%s3 + $0x74] sm:$0xf]
    %v147 = vld [vmem:[%s3 + $0x78] sm:$0xf]
    %v148 = vld [vmem:[%s3 + $0x7c] sm:$0xf]
    %v149 = vld [vmem:[%s3 + $0x80] sm:$0xf]
    %v150 = vld [vmem:[%s3 + $0x84] sm:$0xf]
    %v151 = vld [vmem:[%s3 + $0x88] sm:$0xf]
    %v152 = vld [vmem:[%s3 + $0x8c] sm:$0xf]
    %v153 = vld [vmem:[%s3 + $0x90] sm:$0xf]
    %v154 = vld [vmem:[%s3 + $0x94] sm:$0xf]
    %v155 = vld [vmem:[%s3 + $0x98] sm:$0xf]
    %v156 = vld [vmem:[%s3 + $0x9c] sm:$0xf]
    %v157 = vld [vmem:[%s3 + $0xa0] sm:$0xf]
    %v158 = vld [vmem:[%s3 + $0xa4] sm:$0xf]
    %v159 = vld [vmem:[%s3 + $0xa8] sm:$0xf]
    %v160 = vld [vmem:[%s3 + $0xac] sm:$0xf]
    %v161 = vld [vmem:[%s3 + $0xb0] sm:$0xf]
    %v162 = vld [vmem:[%s3 + $0xb4] sm:$0xf]
    %v163 = vld [vmem:[%s3 + $0xb8] sm:$0xf]
    %v164 = vld [vmem:[%s3 + $0xbc] sm:$0xf]
    %v165 = vld [vmem:[%s3 + $0xc0] sm:$0xf]
    %v166 = vld [vmem:[%s3 + $0xc4] sm:$0xf]
    %v167 = vld [vmem:[%s3 + $0xc8] sm:$0xf]
    %v168 = vld [vmem:[%s3 + $0xcc] sm:$0xf]
    %v169 = vld [vmem:[%s3 + $0xd0] sm:$0xf]
    %v170 = vld [vmem:[%s3 + $0xd4] sm:$0xf]
    %v171 = vld [vmem:[%s3 + $0xd8] sm:$0xf]
    %v172 = vld [vmem:[%s3 + $0xdc] sm:$0xf]
    %v173 = vld [vmem:[%s3 + $0xe0] sm:$0xf]
    %v174 = vld [vmem:[%s3 + $0xe4] sm:$0xf]
    %v175 = vld [vmem:[%s3 + $0xe8] sm:$0xf]
    %v176 = vld [vmem:[%s3 + $0xec] sm:$0xf]
    %v177 = vld [vmem:[%s3 + $0xf0] sm:$0xf]
    %v178 = vld [vmem:[%s3 + $0xf4] sm:$0xf]
    %v179 = vld [vmem:[%s3 + $0xf8] sm:$0xf]
    %v180 = vld [vmem:[%s3 + $0xfc] sm:$0xf]
    %v181 = vld [vmem:[%s3 + $0x100] sm:$0xf]
    %v182 = vld [vmem:[%s3 + $0x104] sm:$0xf]
    %v183 = vld [vmem:[%s3 + $0x108] sm:$0xf]
    %v184 = vld [vmem:[%s3 + $0x10c] sm:$0xf]
    %v185 = vld [vmem:[%s3 + $0x110] sm:$0xf]
    %v186 = vld [vmem:[%s3 + $0x114] sm:$0xf]
    %v187 = vld [vmem:[%s3 + $0x118] sm:$0xf]
    %v188 = vld [vmem:[%s3 + $0x11c] sm:$0xf]
    %v189 = vld [vmem:[%s3 + $0x120] sm:$0xf]
    %v190 = vld [vmem:[%s3 + $0x124] sm:$0xf]
    %v191 = vld [vmem:[%s3 + $0x128] sm:$0xf]
    %v192 = vld [vmem:[%s3 + $0x12c] sm:$0xf]
    %v193 = vld [vmem:[%s3 + $0x130] sm:$0xf]
    %v194 = vld [vmem:[%s3 + $0x134] sm:$0xf]
    %v195 = vld [vmem:[%s3 + $0x138] sm:$0xf]
    %v196 = vld [vmem:[%s3 + $0x13c] sm:$0xf]
    %v197 = vld [vmem:[%s3 + $0x140] sm:$0xf]
    %v198 = vld [vmem:[%s3 + $0x144] sm:$0xf]
    %v199 = vld [vmem:[%s3 + $0x148] sm:$0xf]
    %v200 = vld [vmem:[%s3 + $0x14c] sm:$0xf]
    %v201 = vld [vmem:[%s3 + $0x150] sm:$0xf]
    %v202 = vld [vmem:[%s3 + $0x154] sm:$0xf]
    %v203 = vld [vmem:[%s3 + $0x158] sm:$0xf]
    %v204 = vld [vmem:[%s3 + $0x15c] sm:$0xf]
    %v205 = vld [vmem:[%s3 + $0x160] sm:$0xf]
    %v206 = vld [vmem:[%s3 + $0x164] sm:$0xf]
    %v207 = vld [vmem:[%s3 + $0x168] sm:$0xf]
    %v208 = vld [vmem:[%s3 + $0x16c] sm:$0xf]
    %v209 = vld [vmem:[%s3 + $0x170] sm:$0xf]
    %v210 = vld [vmem:[%s3 + $0x174] sm:$0xf]
    %v211 = vld [vmem:[%s3 + $0x178] sm:$0xf]
    %v212 = vld [vmem:[%s3 + $0x17c] sm:$0xf]
    %v213 = vld [vmem:[%s3 + $0x180] sm:$0xf]
    %v214 = vld [vmem:[%s3 + $0x184] sm:$0xf]
    %v215 = vld [vmem:[%s3 + $0x188] sm:$0xf]
    %v216 = vld [vmem:[%s3 + $0x18c] sm:$0xf]
    %v217 = vld [vmem:[%s3 + $0x190] sm:$0xf]
    %v218 = vld [vmem:[%s3 + $0x194] sm:$0xf]
    %v219 = vld [vmem:[%s3 + $0x198] sm:$0xf]
    %v220 = vld [vmem:[%s3 + $0x19c] sm:$0xf]
    %v221 = vld [vmem:[%s3 + $0x1a0] sm:$0xf]
    %v222 = vld [vmem:[%s3 + $0x1a4] sm:$0xf]
    %v223 = vld [vmem:[%s3 + $0x1a8] sm:$0xf]
    %v224 = vld [vmem:[%s3 + $0x1ac] sm:$0xf]
    %v225 = vld [vmem:[%s3 + $0x1b0] sm:$0xf]
    %v226 = vld [vmem:[%s3 + $0x1b4] sm:$0xf]
    %v227 = vld [vmem:[%s3 + $0x1b8] sm:$0xf]
    %v228 = vld [vmem:[%s3 + $0x1bc] sm:$0xf]
    %v229 = vld [vmem:[%s3 + $0x1c0] sm:$0xf]
    %v230 = vld [vmem:[%s3 + $0x1c4] sm:$0xf]
    %v231 = vld [vmem:[%s3 + $0x1c8] sm:$0xf]
    %v232 = vld [vmem:[%s3 + $0x1cc] sm:$0xf]
    %v233 = vld [vmem:[%s3 + $0x1d0] sm:$0xf]
    %v234 = vld [vmem:[%s3 + $0x1d4] sm:$0xf]
    %v235 = vld [vmem:[%s3 + $0x1d8] sm:$0xf]
    %v236 = vld [vmem:[%s3 + $0x1dc] sm:$0xf]
    %v237 = vld [vmem:[%s3 + $0x1e0] sm:$0xf]
    %v238 = vld [vmem:[%s3 + $0x1e4] sm:$0xf]
    %v239 = vld [vmem:[%s3 + $0x1e8] sm:$0xf]
    %v240 = vld [vmem:[%s3 + $0x1ec] sm:$0xf]
    %v241 = vld [vmem:[%s3 + $0x1f0] sm:$0xf]
    %v242 = vld [vmem:[%s3 + $0x1f4] sm:$0xf]
    %v243 = vld [vmem:[%s3 + $0x1f8] sm:$0xf]
    %v244 = vld [vmem:[%s3 + $0x1fc] sm:$0xf]
    %v245 = vld [vmem:[%s6] sm:$0x1]
    %v246 = vperm.slane %v245, 0
    %v375 = vunpack.c.l.b16 %v117
    %v376 = vunpack.c.l.b16 %v118
    %v377 = vunpack.c.l.b16 %v119
    %v378 = vunpack.c.l.b16 %v120
    %v379 = vunpack.c.l.b16 %v121
    %v380 = vunpack.c.l.b16 %v122
    %v381 = vunpack.c.l.b16 %v123
    %v382 = vunpack.c.l.b16 %v124
    %v383 = vunpack.c.l.b16 %v125
    %v384 = vunpack.c.l.b16 %v126
    %v385 = vunpack.c.l.b16 %v127
    %v386 = vunpack.c.l.b16 %v128
    %v387 = vunpack.c.l.b16 %v129
    %v388 = vunpack.c.l.b16 %v130
    %v389 = vunpack.c.l.b16 %v131
    %v390 = vunpack.c.l.b16 %v132
    %v391 = vunpack.c.l.b16 %v133
    %v392 = vunpack.c.l.b16 %v134
    %v393 = vunpack.c.l.b16 %v135
    %v394 = vunpack.c.l.b16 %v136
    %v395 = vunpack.c.l.b16 %v137
    %v396 = vunpack.c.l.b16 %v138
    %v397 = vunpack.c.l.b16 %v139
    %v398 = vunpack.c.l.b16 %v140
    %v399 = vunpack.c.l.b16 %v141
    %v400 = vunpack.c.l.b16 %v142
    %v401 = vunpack.c.l.b16 %v143
    %v402 = vunpack.c.l.b16 %v144
    %v403 = vunpack.c.l.b16 %v145
    %v404 = vunpack.c.l.b16 %v146
    %v405 = vunpack.c.l.b16 %v147
    %v406 = vunpack.c.l.b16 %v148
    %v407 = vunpack.c.l.b16 %v149
    %v408 = vunpack.c.l.b16 %v150
    %v409 = vunpack.c.l.b16 %v151
    %v410 = vunpack.c.l.b16 %v152
    %v411 = vunpack.c.l.b16 %v153
    %v412 = vunpack.c.l.b16 %v154
    %v413 = vunpack.c.l.b16 %v155
    %v414 = vunpack.c.l.b16 %v156
    %v415 = vunpack.c.l.b16 %v157
    %v416 = vunpack.c.l.b16 %v158
    %v417 = vunpack.c.l.b16 %v159
    %v418 = vunpack.c.l.b16 %v160
    %v419 = vunpack.c.l.b16 %v161
    %v420 = vunpack.c.l.b16 %v162
    %v421 = vunpack.c.l.b16 %v163
    %v422 = vunpack.c.l.b16 %v164
    %v423 = vunpack.c.l.b16 %v165
    %v424 = vunpack.c.l.b16 %v166
    %v425 = vunpack.c.l.b16 %v167
    %v426 = vunpack.c.l.b16 %v168
    %v427 = vunpack.c.l.b16 %v169
    %v428 = vunpack.c.l.b16 %v170
    %v429 = vunpack.c.l.b16 %v171
    %v430 = vunpack.c.l.b16 %v172
    %v431 = vunpack.c.l.b16 %v173
    %v432 = vunpack.c.l.b16 %v174
    %v433 = vunpack.c.l.b16 %v175
    %v434 = vunpack.c.l.b16 %v176
    %v435 = vunpack.c.l.b16 %v177
    %v436 = vunpack.c.l.b16 %v178
    %v437 = vunpack.c.l.b16 %v179
    %v438 = vunpack.c.l.b16 %v180
    %v439 = vunpack.c.l.b16 %v181
    %v440 = vunpack.c.l.b16 %v182
    %v441 = vunpack.c.l.b16 %v183
    %v442 = vunpack.c.l.b16 %v184
    %v443 = vunpack.c.l.b16 %v185
    %v444 = vunpack.c.l.b16 %v186
    %v445 = vunpack.c.l.b16 %v187
    %v446 = vunpack.c.l.b16 %v188
    %v447 = vunpack.c.l.b16 %v189
    %v448 = vunpack.c.l.b16 %v190
    %v449 = vunpack.c.l.b16 %v191
    %v450 = vunpack.c.l.b16 %v192
    %v451 = vunpack.c.l.b16 %v193
    %v452 = vunpack.c.l.b16 %v194
    %v453 = vunpack.c.l.b16 %v195
    %v454 = vunpack.c.l.b16 %v196
    %v455 = vunpack.c.l.b16 %v197
    %v456 = vunpack.c.l.b16 %v198
    %v457 = vunpack.c.l.b16 %v199
    %v458 = vunpack.c.l.b16 %v200
    %v459 = vunpack.c.l.b16 %v201
    %v460 = vunpack.c.l.b16 %v202
    %v461 = vunpack.c.l.b16 %v203
    %v462 = vunpack.c.l.b16 %v204
    %v463 = vunpack.c.l.b16 %v205
    %v464 = vunpack.c.l.b16 %v206
    %v465 = vunpack.c.l.b16 %v207
    %v466 = vunpack.c.l.b16 %v208
    %v467 = vunpack.c.l.b16 %v209
    %v468 = vunpack.c.l.b16 %v210
    %v469 = vunpack.c.l.b16 %v211
    %v470 = vunpack.c.l.b16 %v212
    %v471 = vunpack.c.l.b16 %v213
    %v472 = vunpack.c.l.b16 %v214
    %v473 = vunpack.c.l.b16 %v215
    %v474 = vunpack.c.l.b16 %v216
    %v475 = vunpack.c.l.b16 %v217
    %v476 = vunpack.c.l.b16 %v218
    %v477 = vunpack.c.l.b16 %v219
    %v478 = vunpack.c.l.b16 %v220
    %v479 = vunpack.c.l.b16 %v221
    %v480 = vunpack.c.l.b16 %v222
    %v481 = vunpack.c.l.b16 %v223
    %v482 = vunpack.c.l.b16 %v224
    %v483 = vunpack.c.l.b16 %v225
    %v484 = vunpack.c.l.b16 %v226
    %v485 = vunpack.c.l.b16 %v227
    %v486 = vunpack.c.l.b16 %v228
    %v487 = vunpack.c.l.b16 %v229
    %v488 = vunpack.c.l.b16 %v230
    %v489 = vunpack.c.l.b16 %v231
    %v490 = vunpack.c.l.b16 %v232
    %v491 = vunpack.c.l.b16 %v233
    %v492 = vunpack.c.l.b16 %v234
    %v493 = vunpack.c.l.b16 %v235
    %v494 = vunpack.c.l.b16 %v236
    %v495 = vunpack.c.l.b16 %v237
    %v496 = vunpack.c.l.b16 %v238
    %v497 = vunpack.c.l.b16 %v239
    %v498 = vunpack.c.l.b16 %v240
    %v499 = vunpack.c.l.b16 %v241
    %v500 = vunpack.c.l.b16 %v242
    %v501 = vunpack.c.l.b16 %v243
    %v502 = vunpack.c.l.b16 %v244
    %v503 = vpack.c.b16 %v376, %v375
    %v504 = vpack.c.b16 %v378, %v377
    %v505 = vpack.c.b16 %v380, %v379
    %v506 = vpack.c.b16 %v382, %v381
    %v507 = vpack.c.b16 %v384, %v383
    %v508 = vpack.c.b16 %v386, %v385
    %v509 = vpack.c.b16 %v388, %v387
    %v510 = vpack.c.b16 %v390, %v389
    %v511 = vpack.c.b16 %v392, %v391
    %v512 = vpack.c.b16 %v394, %v393
    %v513 = vpack.c.b16 %v396, %v395
    %v514 = vpack.c.b16 %v398, %v397
    %v515 = vpack.c.b16 %v400, %v399
    %v516 = vpack.c.b16 %v402, %v401
    %v517 = vpack.c.b16 %v404, %v403
    %v518 = vpack.c.b16 %v406, %v405
    %v519 = vpack.c.b16 %v408, %v407
    %v520 = vpack.c.b16 %v410, %v409
    %v521 = vpack.c.b16 %v412, %v411
    %v522 = vpack.c.b16 %v414, %v413
    %v523 = vpack.c.b16 %v416, %v415
    %v524 = vpack.c.b16 %v418, %v417
    %v525 = vpack.c.b16 %v420, %v419
    %v526 = vpack.c.b16 %v422, %v421
    %v527 = vpack.c.b16 %v424, %v423
    %v528 = vpack.c.b16 %v426, %v425
    %v529 = vpack.c.b16 %v428, %v427
    %v530 = vpack.c.b16 %v430, %v429
    %v531 = vpack.c.b16 %v432, %v431
    %v532 = vpack.c.b16 %v434, %v433
    %v533 = vpack.c.b16 %v436, %v435
    %v534 = vpack.c.b16 %v438, %v437
    %v535 = vpack.c.b16 %v440, %v439
    %v536 = vpack.c.b16 %v442, %v441
    %v537 = vpack.c.b16 %v444, %v443
    %v538 = vpack.c.b16 %v446, %v445
    %v539 = vpack.c.b16 %v448, %v447
    %v540 = vpack.c.b16 %v450, %v449
    %v541 = vpack.c.b16 %v452, %v451
    %v542 = vpack.c.b16 %v454, %v453
    %v543 = vpack.c.b16 %v456, %v455
    %v544 = vpack.c.b16 %v458, %v457
    %v545 = vpack.c.b16 %v460, %v459
    %v546 = vpack.c.b16 %v462, %v461
    %v547 = vpack.c.b16 %v464, %v463
    %v548 = vpack.c.b16 %v466, %v465
    %v549 = vpack.c.b16 %v468, %v467
    %v550 = vpack.c.b16 %v470, %v469
    %v551 = vpack.c.b16 %v472, %v471
    %v552 = vpack.c.b16 %v474, %v473
    %v553 = vpack.c.b16 %v476, %v475
    %v554 = vpack.c.b16 %v478, %v477
    %v555 = vpack.c.b16 %v480, %v479
    %v556 = vpack.c.b16 %v482, %v481
    %v557 = vpack.c.b16 %v484, %v483
    %v558 = vpack.c.b16 %v486, %v485
    %v559 = vpack.c.b16 %v488, %v487
    %v560 = vpack.c.b16 %v490, %v489
    %v561 = vpack.c.b16 %v492, %v491
    %v562 = vpack.c.b16 %v494, %v493
    %v563 = vpack.c.b16 %v496, %v495
    %v564 = vpack.c.b16 %v498, %v497
    %v565 = vpack.c.b16 %v500, %v499
    %v566 = vpack.c.b16 %v502, %v501
    %631 = vmatpush.bf16.msra.mxu0 %v510
    %632 = vmatpush.bf16.msra.mxu0 %v509
    %633 = vmatpush.bf16.msra.mxu0 %v508
    %634 = vmatpush.bf16.msra.mxu0 %v507
    %635 = vmatpush.bf16.msra.mxu0 %v506
    %636 = vmatpush.bf16.msra.mxu0 %v505
    %637 = vmatpush.bf16.msra.mxu0 %v504
    %638 = vmatpush.bf16.msra.mxu0 %v503
    %639 = vmatmul.bf16.gmra.mxu0 %v109
    %v640 = vpop.f32.mrf.mxu0
    %v641 = vadd.f32 %v246, %v640
    %v642 = vpop.f32.mrf.mxu0
    %643 = vdwg.mxu0
    %644 = vmatpush.bf16.msra.mxu0 %v518
    %645 = vmatpush.bf16.msra.mxu0 %v517
    %646 = vmatpush.bf16.msra.mxu0 %v516
    %647 = vmatpush.bf16.msra.mxu0 %v515
    %648 = vmatpush.bf16.msra.mxu0 %v514
    %649 = vmatpush.bf16.msra.mxu0 %v513
    %650 = vmatpush.bf16.msra.mxu0 %v512
    %651 = vmatpush.bf16.msra.mxu0 %v511
    %652 = vmatmul.bf16.gmra.mxu0 %v110
    %v653 = vpop.f32.mrf.mxu0
    %v654 = vadd.f32 %v641, %v653
    %v655 = vpop.f32.mrf.mxu0
    %656 = vdwg.mxu0
    %657 = vmatpush.bf16.msra.mxu0 %v526
    %658 = vmatpush.bf16.msra.mxu0 %v525
    %659 = vmatpush.bf16.msra.mxu0 %v524
    %660 = vmatpush.bf16.msra.mxu0 %v523
    %661 = vmatpush.bf16.msra.mxu0 %v522
    %662 = vmatpush.bf16.msra.mxu0 %v521
    %663 = vmatpush.bf16.msra.mxu0 %v520
    %664 = vmatpush.bf16.msra.mxu0 %v519
    %665 = vmatmul.bf16.gmra.mxu0 %v111
    %v666 = vpop.f32.mrf.mxu0
    %v667 = vadd.f32 %v654, %v666
    %v668 = vpop.f32.mrf.mxu0
    %669 = vdwg.mxu0
    %670 = vmatpush.bf16.msra.mxu0 %v534
    %671 = vmatpush.bf16.msra.mxu0 %v533
    %672 = vmatpush.bf16.msra.mxu0 %v532
    %673 = vmatpush.bf16.msra.mxu0 %v531
    %674 = vmatpush.bf16.msra.mxu0 %v530
    %675 = vmatpush.bf16.msra.mxu0 %v529
    %676 = vmatpush.bf16.msra.mxu0 %v528
    %677 = vmatpush.bf16.msra.mxu0 %v527
    %678 = vmatmul.bf16.gmra.mxu0 %v112
    %v679 = vpop.f32.mrf.mxu0
    %v680 = vadd.f32 %v667, %v679
    %v681 = vpop.f32.mrf.mxu0
    %682 = vdwg.mxu0
    %683 = vmatpush.bf16.msra.mxu0 %v542
    %684 = vmatpush.bf16.msra.mxu0 %v541
    %685 = vmatpush.bf16.msra.mxu0 %v540
    %686 = vmatpush.bf16.msra.mxu0 %v539
    %687 = vmatpush.bf16.msra.mxu0 %v538
    %688 = vmatpush.bf16.msra.mxu0 %v537
    %689 = vmatpush.bf16.msra.mxu0 %v536
    %690 = vmatpush.bf16.msra.mxu0 %v535
    %691 = vmatmul.bf16.gmra.mxu0 %v113
    %v692 = vpop.f32.mrf.mxu0
    %v693 = vadd.f32 %v680, %v692
    %v694 = vpop.f32.mrf.mxu0
    %695 = vdwg.mxu0
    %696 = vmatpush.bf16.msra.mxu0 %v550
    %697 = vmatpush.bf16.msra.mxu0 %v549
    %698 = vmatpush.bf16.msra.mxu0 %v548
    %699 = vmatpush.bf16.msra.mxu0 %v547
    %700 = vmatpush.bf16.msra.mxu0 %v546
    %701 = vmatpush.bf16.msra.mxu0 %v545
    %702 = vmatpush.bf16.msra.mxu0 %v544
    %703 = vmatpush.bf16.msra.mxu0 %v543
    %704 = vmatmul.bf16.gmra.mxu0 %v114
    %v705 = vpop.f32.mrf.mxu0
    %v706 = vadd.f32 %v693, %v705
    %v707 = vpop.f32.mrf.mxu0
    %708 = vdwg.mxu0
    %709 = vmatpush.bf16.msra.mxu0 %v558
    %710 = vmatpush.bf16.msra.mxu0 %v557
    %711 = vmatpush.bf16.msra.mxu0 %v556
    %712 = vmatpush.bf16.msra.mxu0 %v555
    %713 = vmatpush.bf16.msra.mxu0 %v554
    %714 = vmatpush.bf16.msra.mxu0 %v553
    %715 = vmatpush.bf16.msra.mxu0 %v552
    %716 = vmatpush.bf16.msra.mxu0 %v551
    %717 = vmatmul.bf16.gmra.mxu0 %v115
    %v718 = vpop.f32.mrf.mxu0
    %v719 = vadd.f32 %v706, %v718
    %v720 = vpop.f32.mrf.mxu0
    %721 = vdwg.mxu0
    %722 = vmatpush.bf16.msra.mxu0 %v566
    %723 = vmatpush.bf16.msra.mxu0 %v565
    %724 = vmatpush.bf16.msra.mxu0 %v564
    %725 = vmatpush.bf16.msra.mxu0 %v563
    %726 = vmatpush.bf16.msra.mxu0 %v562
    %727 = vmatpush.bf16.msra.mxu0 %v561
    %728 = vmatpush.bf16.msra.mxu0 %v560
    %729 = vmatpush.bf16.msra.mxu0 %v559
    %730 = vmatmul.bf16.gmra.mxu0 %v116
    %v731 = vpop.f32.mrf.mxu0
    %v732 = vadd.f32 %v719, %v731
    %v733 = vpop.f32.mrf.mxu0
    %734 = vdwg.mxu0
    %vm735 = vcmask 261120
    %v736 = vsel %vm735, %v732, 0.0
    %737 = vadd.xlane.f32.xlu0 %v736
    %v738 = vpop.xlane.xlu0 %737
    %v739 = vrcp.pop 32.0
    %v740 = vmul.f32 32.0, %v739
    %v741 = vsub.f32 1.0, %v740
    %v742 = vmul.f32 %v739, %v741
    %v743 = vadd.f32 %v739, %v742
    %vm744 = vweird.f32 %v739
    %v745 = vsel %vm744, %v739, %v743
    %v746 = vmul.f32 %v738, %v745
    %v747 = vsub.f32 %v732, %v746
    %v748 = vmul.f32 %v747, %v747
    %v749 = vsel %vm735, %v748, 0.0
    %750 = vadd.xlane.f32.xlu0 %v749
    %v751 = vpop.xlane.xlu0 %750
    %v752 = vmul.f32 %v751, %v745
    %v753 = vadd.f32 %v752, 1e-05
    %v754 = vrsqrt.pop %v753
    %v755 = vmul.f32 %v754, %v753
    %v756 = vmul.f32 %v755, %v754
    %v757 = vmul.f32 0.5, %v756
    %v758 = vsub.f32 1.5, %v757
    %v759 = vmul.f32 %v754, %v758
    %vm760 = vweird.f32 %v753
    %vm761 = vweird.f32 %v754
    %vm762 = vmor %vm760, %vm761
    %v763 = vsel %vm762, %v754, %v759
    %v764 = vmul.f32 %v747, %v763
    %v765 = vld [vmem:[%s6 + $0x1] sm:$0x1]
    %v766 = vperm.slane %v765, 0
    %v767 = vmul.f32 %v764, %v766
    %v768 = vld [vmem:[%s6 + $0x2] sm:$0x1]
    %v769 = vperm.slane %v768, 0
    %v770 = vadd.f32 %v767, %v769
    %v771 = vmax.f32 %v770, 0.0
    %v772 = vpack.c.bf16 %v771, %v771
    %v773 = vld [vmem:[%s4] sm:$0xf]
    %v774 = vld [vmem:[%s4 + $0x4] sm:$0xf]
    %v775 = vld [vmem:[%s4 + $0x8] sm:$0xf]
    %v776 = vld [vmem:[%s4 + $0xc] sm:$0xf]
    %v777 = vld [vmem:[%s6 + $0x3] sm:$0x1]
    %v778 = vperm.slane %v777, 0
    %v783 = vunpack.c.l.b16 %v773
    %v784 = vunpack.c.l.b16 %v774
    %v785 = vunpack.c.l.b16 %v775
    %v786 = vunpack.c.l.b16 %v776
    %v787 = vpack.c.b16 %v784, %v783
    %v788 = vpack.c.b16 %v786, %v785
    %v792 = vsel %vm735, %v772, 0
    %794 = vmatpush.bf16.msra.mxu0 0
    %795 = vmatpush.bf16.msra.mxu0 0
    %796 = vmatpush.bf16.msra.mxu0 0
    %797 = vmatpush.bf16.msra.mxu0 0
    %798 = vmatpush.bf16.msra.mxu0 0
    %799 = vmatpush.bf16.msra.mxu0 0
    %800 = vmatpush.bf16.msra.mxu0 %v788
    %801 = vmatpush.bf16.msra.mxu0 %v787
    %802 = vmatmul.bf16.gmra.mxu0 %v792
    %v803 = vpop.f32.mrf.mxu0
    %v804 = vadd.f32 %v778, %v803
    %v805 = vpop.f32.mrf.mxu0
    %806 = vdwg.mxu0
    %v807 = vsel %vm735, %v804, 0.0
    %808 = vadd.xlane.f32.xlu0 %v807
    %v809 = vpop.xlane.xlu0 %808
    %v810 = vmul.f32 %v809, %v745
    %v811 = vsub.f32 %v804, %v810
    %v812 = vmul.f32 %v811, %v811
    %v813 = vsel %vm735, %v812, 0.0
    %814 = vadd.xlane.f32.xlu0 %v813
    %v815 = vpop.xlane.xlu0 %814
    %v816 = vmul.f32 %v815, %v745
    %v817 = vadd.f32 %v816, 1e-05
    %v818 = vrsqrt.pop %v817
    %v819 = vmul.f32 %v818, %v817
    %v820 = vmul.f32 %v819, %v818
    %v821 = vmul.f32 0.5, %v820
    %v822 = vsub.f32 1.5, %v821
    %v823 = vmul.f32 %v818, %v822
    %vm824 = vweird.f32 %v817
    %vm825 = vweird.f32 %v818
    %vm826 = vmor %vm824, %vm825
    %v827 = vsel %vm826, %v818, %v823
    %v828 = vmul.f32 %v811, %v827
    %v829 = vld [vmem:[%s6 + $0x4] sm:$0x1]
    %v830 = vperm.slane %v829, 0
    %v831 = vmul.f32 %v828, %v830
    %v832 = vld [vmem:[%s6 + $0x5] sm:$0x1]
    %v833 = vperm.slane %v832, 0
    %v834 = vadd.f32 %v831, %v833
    %v835 = vmax.f32 %v834, 0.0
    %v836 = vpack.c.bf16 %v835, %v835
    %s837 = scalar_lea.vmem %s4, 16
    %v838 = vld [vmem:[%s837] sm:$0xf]
    %v839 = vld [vmem:[%s837 + $0x4] sm:$0xf]
    %v840 = vld [vmem:[%s837 + $0x8] sm:$0xf]
    %v841 = vld [vmem:[%s837 + $0xc] sm:$0xf]
    %v842 = vld [vmem:[%s6 + $0x6] sm:$0x1]
    %v843 = vperm.slane %v842, 0
    %v848 = vunpack.c.l.b16 %v838
    %v849 = vunpack.c.l.b16 %v839
    %v850 = vunpack.c.l.b16 %v840
    %v851 = vunpack.c.l.b16 %v841
    %v852 = vpack.c.b16 %v849, %v848
    %v853 = vpack.c.b16 %v851, %v850
    %v857 = vsel %vm735, %v836, 0
    %859 = vmatpush.bf16.msra.mxu0 0
    %860 = vmatpush.bf16.msra.mxu0 0
    %861 = vmatpush.bf16.msra.mxu0 0
    %862 = vmatpush.bf16.msra.mxu0 0
    %863 = vmatpush.bf16.msra.mxu0 0
    %864 = vmatpush.bf16.msra.mxu0 0
    %865 = vmatpush.bf16.msra.mxu0 %v853
    %866 = vmatpush.bf16.msra.mxu0 %v852
    %867 = vmatmul.bf16.gmra.mxu0 %v857
    %v868 = vpop.f32.mrf.mxu0
    %v869 = vadd.f32 %v843, %v868
    %v870 = vpop.f32.mrf.mxu0
    %871 = vdwg.mxu0
    %v872 = vsel %vm735, %v869, 0.0
    %873 = vadd.xlane.f32.xlu0 %v872
    %v874 = vpop.xlane.xlu0 %873
    %v875 = vmul.f32 %v874, %v745
    %v876 = vsub.f32 %v869, %v875
    %v877 = vmul.f32 %v876, %v876
    %v878 = vsel %vm735, %v877, 0.0
    %879 = vadd.xlane.f32.xlu0 %v878
    %v880 = vpop.xlane.xlu0 %879
    %v881 = vmul.f32 %v880, %v745
    %v882 = vadd.f32 %v881, 1e-05
    %v883 = vrsqrt.pop %v882
    %v884 = vmul.f32 %v883, %v882
    %v885 = vmul.f32 %v884, %v883
    %v886 = vmul.f32 0.5, %v885
    %v887 = vsub.f32 1.5, %v886
    %v888 = vmul.f32 %v883, %v887
    %vm889 = vweird.f32 %v882
    %vm890 = vweird.f32 %v883
    %vm891 = vmor %vm889, %vm890
    %v892 = vsel %vm891, %v883, %v888
    %v893 = vmul.f32 %v876, %v892
    %v894 = vld [vmem:[%s6 + $0x7] sm:$0x1]
    %v895 = vperm.slane %v894, 0
    %v896 = vmul.f32 %v893, %v895
    %v897 = vld [vmem:[%s6 + $0x8] sm:$0x1]
    %v898 = vperm.slane %v897, 0
    %v899 = vadd.f32 %v896, %v898
    %v900 = vmax.f32 %v899, 0.0
    %v901 = vpack.c.bf16 %v900, %v900
    %s902 = scalar_lea.vmem %s4, 32
    %v903 = vld [vmem:[%s902] sm:$0xf]
    %v904 = vld [vmem:[%s902 + $0x4] sm:$0xf]
    %v905 = vld [vmem:[%s902 + $0x8] sm:$0xf]
    %v906 = vld [vmem:[%s902 + $0xc] sm:$0xf]
    %v907 = vld [vmem:[%s6 + $0x9] sm:$0x1]
    %v908 = vperm.slane %v907, 0
    %v913 = vunpack.c.l.b16 %v903
    %v914 = vunpack.c.l.b16 %v904
    %v915 = vunpack.c.l.b16 %v905
    %v916 = vunpack.c.l.b16 %v906
    %v917 = vpack.c.b16 %v914, %v913
    %v918 = vpack.c.b16 %v916, %v915
    %v922 = vsel %vm735, %v901, 0
    %924 = vmatpush.bf16.msra.mxu0 0
    %925 = vmatpush.bf16.msra.mxu0 0
    %926 = vmatpush.bf16.msra.mxu0 0
    %927 = vmatpush.bf16.msra.mxu0 0
    %928 = vmatpush.bf16.msra.mxu0 0
    %929 = vmatpush.bf16.msra.mxu0 0
    %930 = vmatpush.bf16.msra.mxu0 %v918
    %931 = vmatpush.bf16.msra.mxu0 %v917
    %932 = vmatmul.bf16.gmra.mxu0 %v922
    %v933 = vpop.f32.mrf.mxu0
    %v934 = vadd.f32 %v908, %v933
    %v935 = vpop.f32.mrf.mxu0
    %936 = vdwg.mxu0
    %v937 = vld [vmem:[%s2] sm:$0xff]
    %v938 = vmul.f32 %v937, 0.05
    %v939 = vadd.f32 %v934, %v938
    %v940 = vpack.c.bf16 %v939, %v939
    %s941 = scalar_lea.vmem %s4, 48
    %v942 = vld [vmem:[%s941] sm:$0xf]
    %v943 = vld [vmem:[%s941 + $0x4] sm:$0xf]
    %v944 = vld [vmem:[%s941 + $0x8] sm:$0xf]
    %v945 = vld [vmem:[%s941 + $0xc] sm:$0xf]
    %v946 = vld [vmem:[%s6 + $0xa] sm:$0x1]
    %v947 = vperm.slane %v946, 0
    %v952 = vunpack.c.l.b16 %v942
    %v953 = vunpack.c.l.b16 %v943
    %v954 = vunpack.c.l.b16 %v944
    %v955 = vunpack.c.l.b16 %v945
    %v956 = vpack.c.b16 %v953, %v952
    %v957 = vpack.c.b16 %v955, %v954
    %v961 = vsel %vm735, %v940, 0
    %963 = vmatpush.bf16.msra.mxu0 0
    %964 = vmatpush.bf16.msra.mxu0 0
    %965 = vmatpush.bf16.msra.mxu0 0
    %966 = vmatpush.bf16.msra.mxu0 0
    %967 = vmatpush.bf16.msra.mxu0 0
    %968 = vmatpush.bf16.msra.mxu0 0
    %969 = vmatpush.bf16.msra.mxu0 %v957
    %970 = vmatpush.bf16.msra.mxu0 %v956
    %971 = vmatmul.bf16.gmra.mxu0 %v961
    %v972 = vpop.f32.mrf.mxu0
    %v973 = vadd.f32 %v947, %v972
    %v974 = vpop.f32.mrf.mxu0
    %975 = vdwg.mxu0
    %v976 = vsel %vm735, %v973, 0.0
    %977 = vadd.xlane.f32.xlu0 %v976
    %v978 = vpop.xlane.xlu0 %977
    %v979 = vmul.f32 %v978, %v745
    %v980 = vsub.f32 %v973, %v979
    %v981 = vmul.f32 %v980, %v980
    %v982 = vsel %vm735, %v981, 0.0
    %983 = vadd.xlane.f32.xlu0 %v982
    %v984 = vpop.xlane.xlu0 %983
    %v985 = vmul.f32 %v984, %v745
    %v986 = vadd.f32 %v985, 1e-05
    %v987 = vrsqrt.pop %v986
    %v988 = vmul.f32 %v987, %v986
    %v989 = vmul.f32 %v988, %v987
    %v990 = vmul.f32 0.5, %v989
    %v991 = vsub.f32 1.5, %v990
    %v992 = vmul.f32 %v987, %v991
    %vm993 = vweird.f32 %v986
    %vm994 = vweird.f32 %v987
    %vm995 = vmor %vm993, %vm994
    %v996 = vsel %vm995, %v987, %v992
    %v997 = vmul.f32 %v980, %v996
    %v998 = vld [vmem:[%s6 + $0xb] sm:$0x1]
    %v999 = vperm.slane %v998, 0
    %v1000 = vmul.f32 %v997, %v999
    %v1001 = vld [vmem:[%s6 + $0xc] sm:$0x1]
    %v1002 = vperm.slane %v1001, 0
    %v1003 = vadd.f32 %v1000, %v1002
    %v1004 = vmax.f32 %v1003, 0.0
    %v1005 = vpack.c.bf16 %v1004, %v1004
    %s1006 = scalar_lea.vmem %s4, 64
    %v1007 = vld [vmem:[%s1006] sm:$0xf]
    %v1008 = vld [vmem:[%s1006 + $0x4] sm:$0xf]
    %v1009 = vld [vmem:[%s1006 + $0x8] sm:$0xf]
    %v1010 = vld [vmem:[%s1006 + $0xc] sm:$0xf]
    %v1011 = vld [vmem:[%s6 + $0xd] sm:$0x1]
    %v1012 = vperm.slane %v1011, 0
    %v1017 = vunpack.c.l.b16 %v1007
    %v1018 = vunpack.c.l.b16 %v1008
    %v1019 = vunpack.c.l.b16 %v1009
    %v1020 = vunpack.c.l.b16 %v1010
    %v1021 = vpack.c.b16 %v1018, %v1017
    %v1022 = vpack.c.b16 %v1020, %v1019
    %v1026 = vsel %vm735, %v1005, 0
    %1028 = vmatpush.bf16.msra.mxu0 0
    %1029 = vmatpush.bf16.msra.mxu0 0
    %1030 = vmatpush.bf16.msra.mxu0 0
    %1031 = vmatpush.bf16.msra.mxu0 0
    %1032 = vmatpush.bf16.msra.mxu0 0
    %1033 = vmatpush.bf16.msra.mxu0 0
    %1034 = vmatpush.bf16.msra.mxu0 %v1022
    %1035 = vmatpush.bf16.msra.mxu0 %v1021
    %1036 = vmatmul.bf16.gmra.mxu0 %v1026
    %v1037 = vpop.f32.mrf.mxu0
    %v1038 = vadd.f32 %v1012, %v1037
    %v1039 = vpop.f32.mrf.mxu0
    %1040 = vdwg.mxu0
    %v1041 = vsel %vm735, %v1038, 0.0
    %1042 = vadd.xlane.f32.xlu0 %v1041
    %v1043 = vpop.xlane.xlu0 %1042
    %v1044 = vmul.f32 %v1043, %v745
    %v1045 = vsub.f32 %v1038, %v1044
    %v1046 = vmul.f32 %v1045, %v1045
    %v1047 = vsel %vm735, %v1046, 0.0
    %1048 = vadd.xlane.f32.xlu0 %v1047
    %v1049 = vpop.xlane.xlu0 %1048
    %v1050 = vmul.f32 %v1049, %v745
    %v1051 = vadd.f32 %v1050, 1e-05
    %v1052 = vrsqrt.pop %v1051
    %v1053 = vmul.f32 %v1052, %v1051
    %v1054 = vmul.f32 %v1053, %v1052
    %v1055 = vmul.f32 0.5, %v1054
    %v1056 = vsub.f32 1.5, %v1055
    %v1057 = vmul.f32 %v1052, %v1056
    %vm1058 = vweird.f32 %v1051
    %vm1059 = vweird.f32 %v1052
    %vm1060 = vmor %vm1058, %vm1059
    %v1061 = vsel %vm1060, %v1052, %v1057
    %v1062 = vmul.f32 %v1045, %v1061
    %v1063 = vld [vmem:[%s6 + $0xe] sm:$0x1]
    %v1064 = vperm.slane %v1063, 0
    %v1065 = vmul.f32 %v1062, %v1064
    %v1066 = vld [vmem:[%s6 + $0xf] sm:$0x1]
    %v1067 = vperm.slane %v1066, 0
    %v1068 = vadd.f32 %v1065, %v1067
    %v1069 = vmax.f32 %v1068, 0.0
    %v1070 = vpack.c.bf16 %v1069, %v1069
    %s1071 = scalar_lea.vmem %s4, 80
    %v1072 = vld [vmem:[%s1071] sm:$0xf]
    %v1073 = vld [vmem:[%s1071 + $0x4] sm:$0xf]
    %v1074 = vld [vmem:[%s1071 + $0x8] sm:$0xf]
    %v1075 = vld [vmem:[%s1071 + $0xc] sm:$0xf]
    %v1076 = vld [vmem:[%s6 + $0x10] sm:$0x1]
    %v1077 = vperm.slane %v1076, 0
    %v1082 = vunpack.c.l.b16 %v1072
    %v1083 = vunpack.c.l.b16 %v1073
    %v1084 = vunpack.c.l.b16 %v1074
    %v1085 = vunpack.c.l.b16 %v1075
    %v1086 = vpack.c.b16 %v1083, %v1082
    %v1087 = vpack.c.b16 %v1085, %v1084
    %v1091 = vsel %vm735, %v1070, 0
    %1093 = vmatpush.bf16.msra.mxu0 0
    %1094 = vmatpush.bf16.msra.mxu0 0
    %1095 = vmatpush.bf16.msra.mxu0 0
    %1096 = vmatpush.bf16.msra.mxu0 0
    %1097 = vmatpush.bf16.msra.mxu0 0
    %1098 = vmatpush.bf16.msra.mxu0 0
    %1099 = vmatpush.bf16.msra.mxu0 %v1087
    %1100 = vmatpush.bf16.msra.mxu0 %v1086
    %1101 = vmatmul.bf16.gmra.mxu0 %v1091
    %v1102 = vpop.f32.mrf.mxu0
    %v1103 = vadd.f32 %v1077, %v1102
    %v1104 = vpop.f32.mrf.mxu0
    %1105 = vdwg.mxu0
    %v1106 = vsel %vm735, %v1103, 0.0
    %1107 = vadd.xlane.f32.xlu0 %v1106
    %v1108 = vpop.xlane.xlu0 %1107
    %v1109 = vmul.f32 %v1108, %v745
    %v1110 = vsub.f32 %v1103, %v1109
    %v1111 = vmul.f32 %v1110, %v1110
    %v1112 = vsel %vm735, %v1111, 0.0
    %1113 = vadd.xlane.f32.xlu0 %v1112
    %v1114 = vpop.xlane.xlu0 %1113
    %v1115 = vmul.f32 %v1114, %v745
    %v1116 = vadd.f32 %v1115, 1e-05
    %v1117 = vrsqrt.pop %v1116
    %v1118 = vmul.f32 %v1117, %v1116
    %v1119 = vmul.f32 %v1118, %v1117
    %v1120 = vmul.f32 0.5, %v1119
    %v1121 = vsub.f32 1.5, %v1120
    %v1122 = vmul.f32 %v1117, %v1121
    %vm1123 = vweird.f32 %v1116
    %vm1124 = vweird.f32 %v1117
    %vm1125 = vmor %vm1123, %vm1124
    %v1126 = vsel %vm1125, %v1117, %v1122
    %v1127 = vmul.f32 %v1110, %v1126
    %v1128 = vld [vmem:[%s6 + $0x11] sm:$0x1]
    %v1129 = vperm.slane %v1128, 0
    %v1130 = vmul.f32 %v1127, %v1129
    %v1131 = vld [vmem:[%s6 + $0x12] sm:$0x1]
    %v1132 = vperm.slane %v1131, 0
    %v1133 = vadd.f32 %v1130, %v1132
    %v1134 = vmax.f32 %v1133, 0.0
    %v1135 = vpack.c.bf16 %v1134, %v1134
    %v1136 = vld [vmem:[%s5] sm:$0xff]
    %v1137 = vld [vmem:[%s5 + $0x8] sm:$0xff]
    %v1138 = vld [vmem:[%s5 + $0x10] sm:$0xff]
    %v1139 = vld [vmem:[%s5 + $0x18] sm:$0xff]
    %v1140 = vld [vmem:[%s5 + $0x20] sm:$0xff]
    %v1141 = vld [vmem:[%s5 + $0x28] sm:$0xff]
    %v1142 = vld [vmem:[%s5 + $0x30] sm:$0xff]
    %v1143 = vld [vmem:[%s5 + $0x38] sm:$0xff]
    %v1144 = vld [vmem:[%s5 + $0x40] sm:$0xff]
    %v1145 = vld [vmem:[%s5 + $0x48] sm:$0xff]
    %v1146 = vld [vmem:[%s5 + $0x50] sm:$0xff]
    %v1147 = vld [vmem:[%s5 + $0x58] sm:$0xff]
    %v1148 = vld [vmem:[%s5 + $0x60] sm:$0xff]
    %v1149 = vld [vmem:[%s5 + $0x68] sm:$0xff]
    %v1150 = vld [vmem:[%s5 + $0x70] sm:$0xff]
    %v1151 = vld [vmem:[%s5 + $0x78] sm:$0xff]
    %v1152 = vld [vmem:[%s7] sm:$0xff]
    %v1154 = vperm.slane %v1152, 0
    %v1155 = vperm.slane %v1152, 1
    %v1156 = vperm.slane %v1152, 2
    %v1157 = vperm.slane %v1152, 3
    %v1158 = vperm.slane %v1152, 4
    %v1159 = vperm.slane %v1152, 5
    %v1160 = vperm.slane %v1152, 6
    %v1161 = vperm.slane %v1152, 7
    %v1186 = vunpack.c.l.b16 %v1136
    %v1187 = vunpack.c.h.b16 %v1136
    %v1188 = vunpack.c.l.b16 %v1137
    %v1189 = vunpack.c.h.b16 %v1137
    %v1190 = vunpack.c.l.b16 %v1138
    %v1191 = vunpack.c.h.b16 %v1138
    %v1192 = vunpack.c.l.b16 %v1139
    %v1193 = vunpack.c.h.b16 %v1139
    %v1194 = vunpack.c.l.b16 %v1140
    %v1195 = vunpack.c.h.b16 %v1140
    %v1196 = vunpack.c.l.b16 %v1141
    %v1197 = vunpack.c.h.b16 %v1141
    %v1198 = vunpack.c.l.b16 %v1142
    %v1199 = vunpack.c.h.b16 %v1142
    %v1200 = vunpack.c.l.b16 %v1143
    %v1201 = vunpack.c.h.b16 %v1143
    %v1202 = vunpack.c.l.b16 %v1144
    %v1203 = vunpack.c.h.b16 %v1144
    %v1204 = vunpack.c.l.b16 %v1145
    %v1205 = vunpack.c.h.b16 %v1145
    %v1206 = vunpack.c.l.b16 %v1146
    %v1207 = vunpack.c.h.b16 %v1146
    %v1208 = vunpack.c.l.b16 %v1147
    %v1209 = vunpack.c.h.b16 %v1147
    %v1210 = vunpack.c.l.b16 %v1148
    %v1211 = vunpack.c.h.b16 %v1148
    %v1212 = vunpack.c.l.b16 %v1149
    %v1213 = vunpack.c.h.b16 %v1149
    %v1214 = vunpack.c.l.b16 %v1150
    %v1215 = vunpack.c.h.b16 %v1150
    %v1216 = vunpack.c.l.b16 %v1151
    %v1217 = vunpack.c.h.b16 %v1151
    %v1218 = vpack.c.b16 %v1194, %v1186
    %v1219 = vpack.c.b16 %v1195, %v1187
    %v1220 = vpack.c.b16 %v1196, %v1188
    %v1221 = vpack.c.b16 %v1197, %v1189
    %v1222 = vpack.c.b16 %v1198, %v1190
    %v1223 = vpack.c.b16 %v1199, %v1191
    %v1224 = vpack.c.b16 %v1200, %v1192
    %v1225 = vpack.c.b16 %v1201, %v1193
    %v1226 = vpack.c.b16 %v1210, %v1202
    %v1227 = vpack.c.b16 %v1211, %v1203
    %v1228 = vpack.c.b16 %v1212, %v1204
    %v1229 = vpack.c.b16 %v1213, %v1205
    %v1230 = vpack.c.b16 %v1214, %v1206
    %v1231 = vpack.c.b16 %v1215, %v1207
    %v1232 = vpack.c.b16 %v1216, %v1208
    %v1233 = vpack.c.b16 %v1217, %v1209
    %v1251 = vsel %vm735, %v1135, 0
    %1253 = vmatpush.bf16.msra.mxu0 0
    %1254 = vmatpush.bf16.msra.mxu0 0
    %1255 = vmatpush.bf16.msra.mxu0 0
    %1256 = vmatpush.bf16.msra.mxu0 0
    %1257 = vmatpush.bf16.msra.mxu0 0
    %1258 = vmatpush.bf16.msra.mxu0 0
    %1259 = vmatpush.bf16.msra.mxu0 %v1226
    %1260 = vmatpush.bf16.msra.mxu0 %v1218
    %1261 = vmatmul.bf16.gmra.mxu0 %v1251
    %v1262 = vpop.f32.mrf.mxu0
    %v1263 = vadd.f32 %v1154, %v1262
    %v1264 = vpop.f32.mrf.mxu0
    %1265 = vdwg.mxu0
    %1266 = vmatpush.bf16.msra.mxu0 0
    %1267 = vmatpush.bf16.msra.mxu0 0
    %1268 = vmatpush.bf16.msra.mxu0 0
    %1269 = vmatpush.bf16.msra.mxu0 0
    %1270 = vmatpush.bf16.msra.mxu0 0
    %1271 = vmatpush.bf16.msra.mxu0 0
    %1272 = vmatpush.bf16.msra.mxu0 %v1227
    %1273 = vmatpush.bf16.msra.mxu0 %v1219
    %1274 = vmatmul.bf16.gmra.mxu0 %v1251
    %v1275 = vpop.f32.mrf.mxu0
    %v1276 = vadd.f32 %v1155, %v1275
    %v1277 = vpop.f32.mrf.mxu0
    %1278 = vdwg.mxu0
    %1279 = vmatpush.bf16.msra.mxu0 0
    %1280 = vmatpush.bf16.msra.mxu0 0
    %1281 = vmatpush.bf16.msra.mxu0 0
    %1282 = vmatpush.bf16.msra.mxu0 0
    %1283 = vmatpush.bf16.msra.mxu0 0
    %1284 = vmatpush.bf16.msra.mxu0 0
    %1285 = vmatpush.bf16.msra.mxu0 %v1228
    %1286 = vmatpush.bf16.msra.mxu0 %v1220
    %1287 = vmatmul.bf16.gmra.mxu0 %v1251
    %v1288 = vpop.f32.mrf.mxu0
    %v1289 = vadd.f32 %v1156, %v1288
    %v1290 = vpop.f32.mrf.mxu0
    %1291 = vdwg.mxu0
    %1292 = vmatpush.bf16.msra.mxu0 0
    %1293 = vmatpush.bf16.msra.mxu0 0
    %1294 = vmatpush.bf16.msra.mxu0 0
    %1295 = vmatpush.bf16.msra.mxu0 0
    %1296 = vmatpush.bf16.msra.mxu0 0
    %1297 = vmatpush.bf16.msra.mxu0 0
    %1298 = vmatpush.bf16.msra.mxu0 %v1229
    %1299 = vmatpush.bf16.msra.mxu0 %v1221
    %1300 = vmatmul.bf16.gmra.mxu0 %v1251
    %v1301 = vpop.f32.mrf.mxu0
    %v1302 = vadd.f32 %v1157, %v1301
    %v1303 = vpop.f32.mrf.mxu0
    %1304 = vdwg.mxu0
    %1305 = vmatpush.bf16.msra.mxu0 0
    %1306 = vmatpush.bf16.msra.mxu0 0
    %1307 = vmatpush.bf16.msra.mxu0 0
    %1308 = vmatpush.bf16.msra.mxu0 0
    %1309 = vmatpush.bf16.msra.mxu0 0
    %1310 = vmatpush.bf16.msra.mxu0 0
    %1311 = vmatpush.bf16.msra.mxu0 %v1230
    %1312 = vmatpush.bf16.msra.mxu0 %v1222
    %1313 = vmatmul.bf16.gmra.mxu0 %v1251
    %v1314 = vpop.f32.mrf.mxu0
    %v1315 = vadd.f32 %v1158, %v1314
    %v1316 = vpop.f32.mrf.mxu0
    %1317 = vdwg.mxu0
    %1318 = vmatpush.bf16.msra.mxu0 0
    %1319 = vmatpush.bf16.msra.mxu0 0
    %1320 = vmatpush.bf16.msra.mxu0 0
    %1321 = vmatpush.bf16.msra.mxu0 0
    %1322 = vmatpush.bf16.msra.mxu0 0
    %1323 = vmatpush.bf16.msra.mxu0 0
    %1324 = vmatpush.bf16.msra.mxu0 %v1231
    %1325 = vmatpush.bf16.msra.mxu0 %v1223
    %1326 = vmatmul.bf16.gmra.mxu0 %v1251
    %v1327 = vpop.f32.mrf.mxu0
    %v1328 = vadd.f32 %v1159, %v1327
    %v1329 = vpop.f32.mrf.mxu0
    %1330 = vdwg.mxu0
    %1331 = vmatpush.bf16.msra.mxu0 0
    %1332 = vmatpush.bf16.msra.mxu0 0
    %1333 = vmatpush.bf16.msra.mxu0 0
    %1334 = vmatpush.bf16.msra.mxu0 0
    %1335 = vmatpush.bf16.msra.mxu0 0
    %1336 = vmatpush.bf16.msra.mxu0 0
    %1337 = vmatpush.bf16.msra.mxu0 %v1232
    %1338 = vmatpush.bf16.msra.mxu0 %v1224
    %1339 = vmatmul.bf16.gmra.mxu0 %v1251
    %v1340 = vpop.f32.mrf.mxu0
    %v1341 = vadd.f32 %v1160, %v1340
    %v1342 = vpop.f32.mrf.mxu0
    %1343 = vdwg.mxu0
    %1344 = vmatpush.bf16.msra.mxu0 0
    %1345 = vmatpush.bf16.msra.mxu0 0
    %1346 = vmatpush.bf16.msra.mxu0 0
    %1347 = vmatpush.bf16.msra.mxu0 0
    %1348 = vmatpush.bf16.msra.mxu0 0
    %1349 = vmatpush.bf16.msra.mxu0 0
    %1350 = vmatpush.bf16.msra.mxu0 %v1233
    %1351 = vmatpush.bf16.msra.mxu0 %v1225
    %1352 = vmatmul.bf16.gmra.mxu0 %v1251
    %v1353 = vpop.f32.mrf.mxu0
    %v1354 = vadd.f32 %v1161, %v1353
    %v1355 = vpop.f32.mrf.mxu0
    %1356 = vdwg.mxu0
    %v1357 = vsub.f32 %v62, 0.003921569
    %v1358 = vsub.f32 %v63, 0.003921569
    %v1359 = vsub.f32 %v64, 0.003921569
    %v1360 = vsub.f32 %v65, 0.003921569
    %v1361 = vsub.f32 %v66, 0.003921569
    %v1362 = vsub.f32 %v67, 0.003921569
    %v1363 = vsub.f32 %v68, 0.003921569
    %v1364 = vsub.f32 %v69, 0.003921569
    %v1373 = vrot.slane %v1276, 6
    %v1374 = vrot.slane %v1289, 4
    %v1375 = vrot.slane %v1302, 2
    %v1376 = vrot.slane %v1328, 6
    %v1377 = vrot.slane %v1341, 4
    %v1378 = vrot.slane %v1354, 2
    %vm1379 = vcmask 1041408
    %v1380 = vsel %vm1379, %v1263, %v1373
    %vm1381 = vcmask 1045508
    %v1382 = vsel %vm1381, %v1374, %v1375
    %vm1383 = vcmask 1043456
    %v1384 = vsel %vm1383, %v1380, %v1382
    %v1385 = vsel %vm1379, %v1315, %v1376
    %v1386 = vsel %vm1381, %v1377, %v1378
    %v1387 = vsel %vm1383, %v1385, %v1386
    %vm1388 = vcmask 1043458
    %v1389 = vsel %vm1388, %v1263, %v1373
    %vm1390 = vcmask 1045504
    %v1391 = vsel %vm1390, %v1375, %v1374
    %vm1392 = vcmask 1045506
    %v1393 = vsel %vm1392, %v1389, %v1391
    %v1394 = vrot.slane %v1393, 2
    %v1395 = vsel %vm1388, %v1315, %v1376
    %v1396 = vsel %vm1390, %v1378, %v1377
    %v1397 = vsel %vm1392, %v1395, %v1396
    %v1398 = vrot.slane %v1397, 2
    %v1399 = vsel %vm1381, %v1263, %v1373
    %v1400 = vsel %vm1379, %v1374, %v1375
    %v1401 = vsel %vm1383, %v1400, %v1399
    %v1402 = vrot.slane %v1401, 4
    %v1403 = vsel %vm1381, %v1315, %v1376
    %v1404 = vsel %vm1379, %v1377, %v1378
    %v1405 = vsel %vm1383, %v1404, %v1403
    %v1406 = vrot.slane %v1405, 4
    %v1407 = vsel %vm1390, %v1373, %v1263
    %v1408 = vsel %vm1388, %v1374, %v1375
    %v1409 = vsel %vm1392, %v1408, %v1407
    %v1410 = vrot.slane %v1409, 6
    %v1411 = vsel %vm1390, %v1376, %v1315
    %v1412 = vsel %vm1388, %v1377, %v1378
    %v1413 = vsel %vm1392, %v1412, %v1411
    %v1414 = vrot.slane %v1413, 6
    %v1423 = vsub.f32 %v1357, %v1384
    %v1424 = vsub.f32 %v1358, %v1387
    %v1425 = vsub.f32 %v1359, %v1394
    %v1426 = vsub.f32 %v1360, %v1398
    %v1427 = vsub.f32 %v1361, %v1402
    %v1428 = vsub.f32 %v1362, %v1406
    %v1429 = vsub.f32 %v1363, %v1410
    %v1430 = vsub.f32 %v1364, %v1414
    %v1431 = vstv %s43
    %v1432 = vmul.f32 %v1423, %v1431
    %v1433 = vmul.f32 %v1424, %v1431
    %v1434 = vmul.f32 %v1425, %v1431
    %v1435 = vmul.f32 %v1426, %v1431
    %v1436 = vmul.f32 %v1427, %v1431
    %v1437 = vmul.f32 %v1428, %v1431
    %v1438 = vmul.f32 %v1429, %v1431
    %v1439 = vmul.f32 %v1430, %v1431
    %v1440 = vmax.f32 %v1432, -87.0
    %v1441 = vmax.f32 %v1433, -87.0
    %v1442 = vmax.f32 %v1434, -87.0
    %v1443 = vmax.f32 %v1435, -87.0
    %v1444 = vmax.f32 %v1436, -87.0
    %v1445 = vmax.f32 %v1437, -87.0
    %v1446 = vmax.f32 %v1438, -87.0
    %v1447 = vmax.f32 %v1439, -87.0
    %v1448 = vsub.f32 0.0, %v1440
    %v1449 = vsub.f32 0.0, %v1441
    %v1450 = vsub.f32 0.0, %v1442
    %v1451 = vsub.f32 0.0, %v1443
    %v1452 = vsub.f32 0.0, %v1444
    %v1453 = vsub.f32 0.0, %v1445
    %v1454 = vsub.f32 0.0, %v1446
    %v1455 = vsub.f32 0.0, %v1447
    %v1456 = vmul.f32 %v1448, 1.442695
    %v1457 = vpow.pop %v1456
    %v1458 = vmul.f32 %v1449, 1.442695
    %v1459 = vpow.pop %v1458
    %v1460 = vmul.f32 %v1450, 1.442695
    %v1461 = vpow.pop %v1460
    %v1462 = vmul.f32 %v1451, 1.442695
    %v1463 = vpow.pop %v1462
    %v1464 = vmul.f32 %v1452, 1.442695
    %v1465 = vpow.pop %v1464
    %v1466 = vmul.f32 %v1453, 1.442695
    %v1467 = vpow.pop %v1466
    %v1468 = vmul.f32 %v1454, 1.442695
    %v1469 = vpow.pop %v1468
    %v1470 = vmul.f32 %v1455, 1.442695
    %v1471 = vpow.pop %v1470
    %v1472 = vadd.f32 %v1457, 1.0
    %v1473 = vadd.f32 %v1459, 1.0
    %v1474 = vadd.f32 %v1461, 1.0
    %v1475 = vadd.f32 %v1463, 1.0
    %v1476 = vadd.f32 %v1465, 1.0
    %v1477 = vadd.f32 %v1467, 1.0
    %v1478 = vadd.f32 %v1469, 1.0
    %v1479 = vadd.f32 %v1471, 1.0
    %v1480 = vstv %s45
    %v1481 = vmul.f32 %v1457, %v1480
    %v1482 = vmul.f32 %v1459, %v1480
    %v1483 = vmul.f32 %v1461, %v1480
    %v1484 = vmul.f32 %v1463, %v1480
    %v1485 = vmul.f32 %v1465, %v1480
    %v1486 = vmul.f32 %v1467, %v1480
    %v1487 = vmul.f32 %v1469, %v1480
    %v1488 = vmul.f32 %v1471, %v1480
    %v1489 = vadd.f32 %v1481, 1.0
    %v1490 = vadd.f32 %v1482, 1.0
    %v1491 = vadd.f32 %v1483, 1.0
    %v1492 = vadd.f32 %v1484, 1.0
    %v1493 = vadd.f32 %v1485, 1.0
    %v1494 = vadd.f32 %v1486, 1.0
    %v1495 = vadd.f32 %v1487, 1.0
    %v1496 = vadd.f32 %v1488, 1.0
    %v1497 = vadd.f32 %v62, 0.003921569
    %v1498 = vadd.f32 %v63, 0.003921569
    %v1499 = vadd.f32 %v64, 0.003921569
    %v1500 = vadd.f32 %v65, 0.003921569
    %v1501 = vadd.f32 %v66, 0.003921569
    %v1502 = vadd.f32 %v67, 0.003921569
    %v1503 = vadd.f32 %v68, 0.003921569
    %v1504 = vadd.f32 %v69, 0.003921569
    %vm1505 = vcmp.gt.f32.partialorder %v1497, 1.0
    %vm1506 = vcmp.gt.f32.partialorder %v1498, 1.0
    %vm1507 = vcmp.gt.f32.partialorder %v1499, 1.0
    %vm1508 = vcmp.gt.f32.partialorder %v1500, 1.0
    %vm1509 = vcmp.gt.f32.partialorder %v1501, 1.0
    %vm1510 = vcmp.gt.f32.partialorder %v1502, 1.0
    %vm1511 = vcmp.gt.f32.partialorder %v1503, 1.0
    %vm1512 = vcmp.gt.f32.partialorder %v1504, 1.0
    %vm1513 = vcmp.lt.f32.partialorder %v1357, -1.0
    %vm1514 = vcmp.lt.f32.partialorder %v1358, -1.0
    %vm1515 = vcmp.lt.f32.partialorder %v1359, -1.0
    %vm1516 = vcmp.lt.f32.partialorder %v1360, -1.0
    %vm1517 = vcmp.lt.f32.partialorder %v1361, -1.0
    %vm1518 = vcmp.lt.f32.partialorder %v1362, -1.0
    %vm1519 = vcmp.lt.f32.partialorder %v1363, -1.0
    %vm1520 = vcmp.lt.f32.partialorder %v1364, -1.0
    %v1521 = vmul.f32 %v1472, %v1489
    %v1522 = vmul.f32 %v1473, %v1490
    %v1523 = vmul.f32 %v1474, %v1491
    %v1524 = vmul.f32 %v1475, %v1492
    %v1525 = vmul.f32 %v1476, %v1493
    %v1526 = vmul.f32 %v1477, %v1494
    %v1527 = vmul.f32 %v1478, %v1495
    %v1528 = vmul.f32 %v1479, %v1496
    %v1529 = vsel %vm1505, %v1472, %v1521
    %v1530 = vsel %vm1506, %v1473, %v1522
    %v1531 = vsel %vm1507, %v1474, %v1523
    %v1532 = vsel %vm1508, %v1475, %v1524
    %v1533 = vsel %vm1509, %v1476, %v1525
    %v1534 = vsel %vm1510, %v1477, %v1526
    %v1535 = vsel %vm1511, %v1478, %v1527
    %v1536 = vsel %vm1512, %v1479, %v1528
    %v1537 = vsel %vm1513, %v1489, %v1529
    %v1538 = vsel %vm1514, %v1490, %v1530
    %v1539 = vsel %vm1515, %v1491, %v1531
    %v1540 = vsel %vm1516, %v1492, %v1532
    %v1541 = vsel %vm1517, %v1493, %v1533
    %v1542 = vsel %vm1518, %v1494, %v1534
    %v1543 = vsel %vm1519, %v1495, %v1535
    %v1544 = vsel %vm1520, %v1496, %v1536
    %v1545 = vstv %s44
    %v1546 = vadd.f32 %v1432, %v1545
    %v1547 = vadd.f32 %v1433, %v1545
    %v1548 = vadd.f32 %v1434, %v1545
    %v1549 = vadd.f32 %v1435, %v1545
    %v1550 = vadd.f32 %v1436, %v1545
    %v1551 = vadd.f32 %v1437, %v1545
    %v1552 = vadd.f32 %v1438, %v1545
    %v1553 = vadd.f32 %v1439, %v1545
    %v1554 = vsel %vm1505, %v1440, %v1546
    %v1555 = vsel %vm1506, %v1441, %v1547
    %v1556 = vsel %vm1507, %v1442, %v1548
    %v1557 = vsel %vm1508, %v1443, %v1549
    %v1558 = vsel %vm1509, %v1444, %v1550
    %v1559 = vsel %vm1510, %v1445, %v1551
    %v1560 = vsel %vm1511, %v1446, %v1552
    %v1561 = vsel %vm1512, %v1447, %v1553
    %v1562 = vsel %vm1513, 0.0, %v1554
    %v1563 = vsel %vm1514, 0.0, %v1555
    %v1564 = vsel %vm1515, 0.0, %v1556
    %v1565 = vsel %vm1516, 0.0, %v1557
    %v1566 = vsel %vm1517, 0.0, %v1558
    %v1567 = vsel %vm1518, 0.0, %v1559
    %v1568 = vsel %vm1519, 0.0, %v1560
    %v1569 = vsel %vm1520, 0.0, %v1561
    %vm1570 = vmor %vm1513, %vm1505
    %vm1571 = vmor %vm1514, %vm1506
    %vm1572 = vmor %vm1515, %vm1507
    %vm1573 = vmor %vm1516, %vm1508
    %vm1574 = vmor %vm1517, %vm1509
    %vm1575 = vmor %vm1518, %vm1510
    %vm1576 = vmor %vm1519, %vm1511
    %vm1577 = vmor %vm1520, %vm1512
    %v1578 = vsel %vm1570, inf, 15.942385
    %v1579 = vsel %vm1571, inf, 15.942385
    %v1580 = vsel %vm1572, inf, 15.942385
    %v1581 = vsel %vm1573, inf, 15.942385
    %v1582 = vsel %vm1574, inf, 15.942385
    %v1583 = vsel %vm1575, inf, 15.942385
    %v1584 = vsel %vm1576, inf, 15.942385
    %v1585 = vsel %vm1577, inf, 15.942385
    %v1586 = vlog2.pop %v1537
    %v1587 = vmul.f32 %v1586, 0.6931472
    %v1588 = vlog2.pop %v1538
    %v1589 = vmul.f32 %v1588, 0.6931472
    %v1590 = vlog2.pop %v1539
    %v1591 = vmul.f32 %v1590, 0.6931472
    %v1592 = vlog2.pop %v1540
    %v1593 = vmul.f32 %v1592, 0.6931472
    %v1594 = vlog2.pop %v1541
    %v1595 = vmul.f32 %v1594, 0.6931472
    %v1596 = vlog2.pop %v1542
    %v1597 = vmul.f32 %v1596, 0.6931472
    %v1598 = vlog2.pop %v1543
    %v1599 = vmul.f32 %v1598, 0.6931472
    %v1600 = vlog2.pop %v1544
    %v1601 = vmul.f32 %v1600, 0.6931472
    %v1602 = vadd.f32 %v1562, %v1587
    %v1603 = vadd.f32 %v1563, %v1589
    %v1604 = vadd.f32 %v1564, %v1591
    %v1605 = vadd.f32 %v1565, %v1593
    %v1606 = vadd.f32 %v1566, %v1595
    %v1607 = vadd.f32 %v1567, %v1597
    %v1608 = vadd.f32 %v1568, %v1599
    %v1609 = vadd.f32 %v1569, %v1601
    %v1610 = vmin.f32 %v1602, %v1578
    %v1611 = vmin.f32 %v1603, %v1579
    %v1612 = vmin.f32 %v1604, %v1580
    %v1613 = vmin.f32 %v1605, %v1581
    %v1614 = vmin.f32 %v1606, %v1582
    %v1615 = vmin.f32 %v1607, %v1583
    %v1616 = vmin.f32 %v1608, %v1584
    %v1617 = vmin.f32 %v1609, %v1585
    %v1618 = vmax.f32 %v1610, 0.0
    %v1619 = vmax.f32 %v1611, 0.0
    %v1620 = vmax.f32 %v1612, 0.0
    %v1621 = vmax.f32 %v1613, 0.0
    %v1622 = vmax.f32 %v1614, 0.0
    %v1623 = vmax.f32 %v1615, 0.0
    %v1624 = vmax.f32 %v1616, 0.0
    %v1625 = vmax.f32 %v1617, 0.0
    %1634 = vst [vmem:[#allocation1] ss:$4 sm:$0xff] %v1618
    %s1635 = scalar_lea.vmem [#allocation1], 1
    %1636 = vst [vmem:[%s1635] ss:$4 sm:$0xff] %v1620
    %s1637 = scalar_lea.vmem [#allocation1], 2
    %1638 = vst [vmem:[%s1637] ss:$4 sm:$0xff] %v1622
    %s1639 = scalar_lea.vmem [#allocation1], 3
    %1640 = vst [vmem:[%s1639] ss:$4 sm:$0xff] %v1624
    %s1641 = scalar_lea.vmem [#allocation1], 32
    %1642 = vst [vmem:[%s1641] ss:$4 sm:$0xff] %v1619
    %s1643 = scalar_lea.vmem [#allocation1], 33
    %1644 = vst [vmem:[%s1643] ss:$4 sm:$0xff] %v1621
    %s1645 = scalar_lea.vmem [#allocation1], 34
    %1646 = vst [vmem:[%s1645] ss:$4 sm:$0xff] %v1623
    %s1647 = scalar_lea.vmem [#allocation1], 35
    %1648 = vst [vmem:[%s1647] ss:$4 sm:$0xff] %v1625
    %v1649 = vld.sshfl [vmem:[#allocation1] sm:$0xff pattern:$0x73625140]
    %v1650 = vld.sshfl [vmem:[#allocation1 + $0x8] sm:$0xff pattern:$0x73625140]
    %v1651 = vld.sshfl [vmem:[#allocation1 + $0x10] sm:$0xff pattern:$0x73625140]
    %v1652 = vld.sshfl [vmem:[#allocation1 + $0x18] sm:$0xff pattern:$0x73625140]
    %v1653 = vld.sshfl [vmem:[#allocation1 + $0x20] sm:$0xff pattern:$0x73625140]
    %v1654 = vld.sshfl [vmem:[#allocation1 + $0x28] sm:$0xff pattern:$0x73625140]
    %v1655 = vld.sshfl [vmem:[#allocation1 + $0x30] sm:$0xff pattern:$0x73625140]
    %v1656 = vld.sshfl [vmem:[#allocation1 + $0x38] sm:$0xff pattern:$0x73625140]
    %v1665 = vadd.f32 %v1649, %v1650
    %v1666 = vadd.f32 %v1665, %v1651
    %v1667 = vadd.f32 %v1666, %v1652
    %v1668 = vadd.f32 %v1667, %v1653
    %v1669 = vadd.f32 %v1668, %v1654
    %v1670 = vadd.f32 %v1669, %v1655
    %v1671 = vadd.f32 %v1670, %v1656
    %1672 = vadd.xlane.f32.xlu0 %v1671
    %v1673 = vpop.xlane.xlu0 %1672
    %v1674 = vmul.f32 %v934, %v934
    %v1675 = vsel %vm735, %v1674, 0.0
    %1676 = vadd.xlane.f32.xlu0 %v1675
    %v1677 = vpop.xlane.xlu0 %1676
    %v1678 = vmul.f32 %v1677, 0.5
    %v1679 = vadd.f32 %v1678, 19.975859
    %v1680 = vadd.f32 %v1673, %v1679
    %vm1681 = vcmask 7168
    %1682 = vst.msk [vmem:[#allocation4] sm:$0xff] %vm1681, %v1680
    // Predicated region
    $region38: #{lae_forward_eval.1} parent=1 // pred_check
      _
    $region39: #{lae_forward_eval.1} parent=1 // pred_check_branch
      %1684 = sbr.rel (0) target = $region41
    $region40: #{lae_forward_eval.1} parent=1 // pred_region
      // Predicated region
      $region42: #{lae_forward_eval.1} parent=40 // pred_check
        _
      $region43: #{lae_forward_eval.1} parent=40 // pred_check_branch
        %1686 = sbr.rel (0) target = $region45
      $region44: #{lae_forward_eval.1} parent=40 // pred_region
        // Predicated region
        $region46: #{lae_forward_eval.1} parent=44 // pred_check
          _
        $region47: #{lae_forward_eval.1} parent=44 // pred_check_branch
          %1688 = sbr.rel target = $region49
        $region48: #{lae_forward_eval.1} parent=44 // pred_region
          // Predicated region
          $region61: #{lae_forward_eval.1} parent=48 // pred_check
            _
          $region62: #{lae_forward_eval.1} parent=48 // pred_check_branch
            %1704 = sbr.rel (0) target = $region64
          $region63: #{lae_forward_eval.1} parent=48 // pred_region
            %s1706 = ssub.s32 4, 1
            loop: start=0, step=1, limit=1
            $region65: #{lae_forward_eval.1} parent=63 // loop_pre_header
              _
            $region66: #{lae_forward_eval.1} parent=63 // loop_header
              %s1708 = sphi 0, %s1712
              %p1709 = scmp.ge.s32.totalorder %s1708, 1
              %s1713 = sphi [#allocation4], [#allocation4]
              %s1714 = sphi %s8, %s8
            $region67: #{lae_forward_eval.1} parent=63 // loop_header_branch
              %1711 = sbr.rel (%p1709) target = $region71
            $region68: #{lae_forward_eval.1} parent=63 // loop_body
              %v1715 = vld [vmem:[%s1713] sm:%s1706]
              %1716 = vst [vmem:[%s1714] sm:%s1706] %v1715
            $region69: #{lae_forward_eval.1} parent=63 // loop_footer
              %s1712 = sadd.s32 1, %s1708
            $region70: #{lae_forward_eval.1} parent=63 // loop_footer_branch
              %1707 = sbr.rel target = $region66
            $region71: #{lae_forward_eval.1} parent=63 // loop_exit
              _
          $region64: #{lae_forward_eval.1} parent=48 // pred_fallthru
            _
        $region49: #{lae_forward_eval.1} parent=44 // pred_fallthru
          _
        // Predicated region
        $region50: #{lae_forward_eval.1} parent=44 // pred_check
          _
        $region51: #{lae_forward_eval.1} parent=44 // pred_check_branch
          %1690 = sbr.rel (0) target = $region53
        $region52: #{lae_forward_eval.1} parent=44 // pred_region
          %s1692 = ssub.s32 4, 1
          loop: start=0, step=1, limit=1
          $region54: #{lae_forward_eval.1} parent=52 // loop_pre_header
            _
          $region55: #{lae_forward_eval.1} parent=52 // loop_header
            %s1694 = sphi 0, %s1698
            %p1695 = scmp.ge.s32.totalorder %s1694, 1
            %s1699 = sphi [#allocation4], [#allocation4]
            %s1700 = sphi %s8, %s8
          $region56: #{lae_forward_eval.1} parent=52 // loop_header_branch
            %1697 = sbr.rel (%p1695) target = $region60
          $region57: #{lae_forward_eval.1} parent=52 // loop_body
            %v1701 = vld [vmem:[%s1699] sm:%s1692]
            %1702 = vst [vmem:[%s1700] sm:%s1692] %v1701
          $region58: #{lae_forward_eval.1} parent=52 // loop_footer
            %s1698 = sadd.s32 1, %s1694
          $region59: #{lae_forward_eval.1} parent=52 // loop_footer_branch
            %1693 = sbr.rel target = $region55
          $region60: #{lae_forward_eval.1} parent=52 // loop_exit
            _
        $region53: #{lae_forward_eval.1} parent=44 // pred_fallthru
          _
      $region45: #{lae_forward_eval.1} parent=40 // pred_fallthru
        _
      %1717 = vnop
    $region41: #{lae_forward_eval.1} parent=1 // pred_fallthru
      _
    // Predicated region
    $region72: #{lae_forward_eval.1} parent=1 // pred_check
      _
    $region73: #{lae_forward_eval.1} parent=1 // pred_check_branch
      %1719 = sbr.rel (0) target = $region75
    $region74: #{lae_forward_eval.1} parent=1 // pred_region
      _
    $region75: #{lae_forward_eval.1} parent=1 // pred_fallthru
      _
    %1720 = vsyncpa [#allocation3], 1

</llo_original>
